<compile_context>
chip_gen: v5e
topology: v5e:2x2
jax: 0.10.0
libtpu: 0.0.40
codegen_flags: <defaults>
</compile_context>

<pallas_src>
import functools

import jax
import jax.numpy as jnp
from jax.experimental import pallas as pl
from jax.experimental.pallas import tpu as pltpu


def _round_up(a: int, m: int) -> int:
    return ((a + m - 1) // m) * m


def ae_kernel(x_ref,
              w1_ref, b1_ref,
              w2_ref, b2_ref,
              wz_ref, bz_ref,
              w3_ref, b3_ref,
              w4_ref, b4_ref,
              w5_ref, b5_ref,
              xbar_ref, z_ref,
              *, half, act_dtype):
    """Fused encoder/decoder MLP for one batch tile.

    The tile is split into two independent halves whose layer chains are
    interleaved to keep the MXU fed through the serial 6-layer dependency.
    """

    def linear_f32(h, w_ref, b_ref):
        # bf16 MXU operands, f32 accumulation, f32 bias add.
        return jnp.dot(h.astype(jnp.bfloat16), w_ref[...],
                       preferred_element_type=jnp.float32) + b_ref[...]

    def relu_layer(hA, hB, w_ref, b_ref):
        # Two independent halves -> scheduler overlaps VPU of one with MXU of
        # the other.  Activations stored in act_dtype (bf16 on v6e/v7x).
        yA = jnp.maximum(linear_f32(hA, w_ref, b_ref), 0.0).astype(act_dtype)
        yB = jnp.maximum(linear_f32(hB, w_ref, b_ref), 0.0).astype(act_dtype)
        return yA, yB

    x = x_ref[...]
    hA = x[:half].astype(act_dtype)
    hB = x[half:].astype(act_dtype)

    # Encoder
    hA, hB = relu_layer(hA, hB, w1_ref, b1_ref)   # relu(enc_1(x))
    hA, hB = relu_layer(hA, hB, w2_ref, b2_ref)   # relu(enc_2(h1))

    # z layer (no relu) — keep the f32 accumulate for the z output.
    zA = linear_f32(hA, wz_ref, bz_ref)
    zB = linear_f32(hB, wz_ref, bz_ref)
    z_ref[:half] = zA.astype(z_ref.dtype)
    z_ref[half:] = zB.astype(z_ref.dtype)

    # Decoder
    hA, hB = relu_layer(zA.astype(act_dtype), zB.astype(act_dtype),
                        w3_ref, b3_ref)           # relu(dec_1(z))
    hA, hB = relu_layer(hA, hB, w4_ref, b4_ref)   # relu(dec_2(d1))

    # x_bar layer (no relu) — f32 accumulate straight to the output.
    xbar_ref[:half] = linear_f32(hA, w5_ref, b5_ref).astype(xbar_ref.dtype)
    xbar_ref[half:] = linear_f32(hB, w5_ref, b5_ref).astype(xbar_ref.dtype)


def _device_config():
    """Per-generation tiling / dtype choices (Python-level, trace-time)."""
    try:
        kind = jax.devices()[0].device_kind.lower()
    except Exception:  # pragma: no cover - defensive
        kind = ""
    is_v5e = ("v5 lite" in kind) or ("v5e" in kind) or ("v5litepod" in kind)
    is_v7 = "v7" in kind
    has_bf16_vpu = ("v6" in kind) or is_v7          # v5e/v4: no bf16 VALU
    n_tc_steps = 2 if is_v7 else 1                  # keep both v7x TCs busy
    block_cap = 384 if is_v5e else 1024             # v5e: single vst slot
    act_dtype = jnp.bfloat16 if has_bf16_vpu else jnp.float32
    return n_tc_steps, block_cap, act_dtype


@functools.partial(jax.jit, static_argnames=("block_b", "act_dtype"))
def _ae_forward_impl(x, params, *, block_b, act_dtype):
    """params = dict of (wN [in,out] bf16, bN [1,out] f32)."""
    B, n_input = x.shape
    n_z = params["wz"].shape[1]

    # --- lane-dense output padding (zeros => mathematically exact) ---------
    n_z_pad = _round_up(n_z, 128)
    n_in_pad = _round_up(n_input, 128)

    wz = jnp.pad(params["wz"], ((0, 0), (0, n_z_pad - n_z)))
    bz = jnp.pad(params["bz"], ((0, 0), (0, n_z_pad - n_z)))
    w3 = jnp.pad(params["w3"], ((0, n_z_pad - n_z), (0, 0)))
    b3 = params["b3"]
    w5 = jnp.pad(params["w5"], ((0, 0), (0, n_in_pad - n_input)))
    b5 = jnp.pad(params["b5"], ((0, 0), (0, n_in_pad - n_input)))
    w1, b1 = params["w1"], params["b1"]
    w2, b2 = params["w2"], params["b2"]
    w4, b4 = params["w4"], params["b4"]

    # --- batch tiling (block_b is a multiple of 16, chosen by the caller) ---
    B_pad = _round_up(B, block_b)
    if B_pad != B:
        x = jnp.pad(x, ((0, B_pad - B), (0, 0)))
    grid = (B_pad // block_b,)

    weights = (w1, b1, w2, b2, wz, bz, w3, b3, w4, b4, w5, b5)

    in_specs = [pl.BlockSpec((block_b, n_input), lambda i: (i, 0))]
    for p in weights:
        in_specs.append(pl.BlockSpec(p.shape, lambda i: (0, 0)))

    out_specs = [
        pl.BlockSpec((block_b, n_in_pad), lambda i: (i, 0)),  # x_bar (padded lanes)
        pl.BlockSpec((block_b, n_z_pad), lambda i: (i, 0)),   # z     (padded lanes)
    ]

    # --- cost estimate + a VMEM limit derived from the real footprint ------
    layer_dims = [(w1.shape[0], w1.shape[1]), (w2.shape[0], w2.shape[1]),
                  (wz.shape[0], wz.shape[1]), (w3.shape[0], w3.shape[1]),
                  (w4.shape[0], w4.shape[1]), (w5.shape[0], w5.shape[1])]
    flops = int(2 * B_pad * sum(k * n for k, n in layer_dims))
    param_bytes = sum(int(p.size) * p.dtype.itemsize for p in weights)
    io_bytes = int(x.size * x.dtype.itemsize
                   + B_pad * (n_in_pad + n_z_pad) * x.dtype.itemsize)
    tile_bytes = block_b * (n_input + n_in_pad + n_z_pad) * 4
    # double-buffered tiles + params + generous headroom; far below the
    # 32 MiB default and the 64 MiB physical VMEM of a v7x TensorCore.
    vmem_limit = min(32 * 1024 * 1024,
                     max(8 * 1024 * 1024, 4 * (param_bytes + tile_bytes)))

    kernel = functools.partial(ae_kernel, half=block_b // 2, act_dtype=act_dtype)

    x_bar, z = pl.pallas_call(
        kernel,
        out_shape=(
            jax.ShapeDtypeStruct((B_pad, n_in_pad), x.dtype),
            jax.ShapeDtypeStruct((B_pad, n_z_pad), x.dtype),
        ),
        grid_spec=pltpu.PrefetchScalarGridSpec(
            num_scalar_prefetch=0,
            grid=grid,
            in_specs=in_specs,
            out_specs=out_specs,
        ),
        compiler_params=pltpu.CompilerParams(
            dimension_semantics=("parallel",),
            vmem_limit_bytes=vmem_limit,
        ),
        cost_estimate=pl.CostEstimate(
            flops=flops, transcendentals=0,
            bytes_accessed=param_bytes + io_bytes),
    )(x, *weights)

    return x_bar[:B, :n_input], z[:B, :n_z]


def ae_forward(x, params, block_b=None):
    """Forward pass: returns (x_bar, z). block_b=None picks a per-chip default."""
    B = x.shape[0]
    n_steps, block_cap, act_dtype = _device_config()
    if block_b is None:
        block_b = _round_up(-(-B // n_steps), 16)   # ceil(B / n_steps) -> x16
        block_b = min(block_b, block_cap)
    # Never larger than the (16-rounded) batch; always a multiple of 16 so the
    # (8,128) constraint and the half/half interleave both hold.
    block_b = _round_up(min(block_b, _round_up(B, 16)), 16)
    return _ae_forward_impl(x, params, block_b=block_b, act_dtype=act_dtype)


def init_linear(key, n_in, n_out):
    """torch.nn.Linear-style init (uniform +/- 1/sqrt(n_in)).
    Returns W as [n_in, n_out] bf16 (transposed vs. PyTorch), b as [1, n_out] f32."""
    kw, kb = jax.random.split(key)
    bound = 1.0 / jnp.sqrt(jnp.asarray(n_in, jnp.float32))
    w = jax.random.uniform(kw, (n_in, n_out), jnp.float32, -bound, bound)
    b = jax.random.uniform(kb, (1, n_out), jnp.float32, -bound, bound)
    return w.astype(jnp.bfloat16), b


def make_params(key, n_enc_1, n_enc_2, n_dec_1, n_dec_2, n_input, n_z):
    keys = jax.random.split(key, 6)
    p = {}
    p["w1"], p["b1"] = init_linear(keys[0], n_input, n_enc_1)   # enc_1
    p["w2"], p["b2"] = init_linear(keys[1], n_enc_1, n_enc_2)   # enc_2
    p["wz"], p["bz"] = init_linear(keys[2], n_enc_2, n_z)       # z_layer
    p["w3"], p["b3"] = init_linear(keys[3], n_z, n_dec_1)       # dec_1
    p["w4"], p["b4"] = init_linear(keys[4], n_dec_1, n_dec_2)   # dec_2
    p["w5"], p["b5"] = init_linear(keys[5], n_dec_2, n_input)   # x_bar_layer
    return p


def ae_reference(x, p):
    """Pure-JAX reference of the PyTorch forward (bf16 operands, f32 accumulate)."""
    def linear(h, w, b):
        return jnp.dot(h.astype(jnp.bfloat16), w,
                       preferred_element_type=jnp.float32) + b
    relu = jax.nn.relu
    h1 = relu(linear(x, p["w1"], p["b1"]))
    h2 = relu(linear(h1, p["w2"], p["b2"]))
    z = linear(h2, p["wz"], p["bz"])
    d1 = relu(linear(z, p["w3"], p["b3"]))
    d2 = relu(linear(d1, p["w4"], p["b4"]))
    x_bar = linear(d2, p["w5"], p["b5"])
    return x_bar, z


if __name__ == "__main__":
    # Small shapes consistent with the module's constructor.
    n_input, n_enc_1, n_enc_2 = 64, 128, 64
    n_dec_1, n_dec_2, n_z = 64, 128, 16
    batch = 256

    key = jax.random.PRNGKey(0)
    kx, kp = jax.random.split(key)
    x = jax.random.normal(kx, (batch, n_input), jnp.float32)
    params = make_params(kp, n_enc_1, n_enc_2, n_dec_1, n_dec_2, n_input, n_z)

    # Auto block_b: 1 grid step on v5e/v6e, 2 steps on v7x (both TCs busy).
    x_bar, z = ae_forward(x, params)
    jax.block_until_ready((x_bar, z))

    # Correctness check against pure-JAX reference (same bf16/f32 math).
    x_bar_ref, z_ref = ae_reference(x, params)
    assert x_bar.shape == (batch, n_input) and z.shape == (batch, n_z)
    assert jnp.allclose(x_bar, x_bar_ref, atol=1e-4, rtol=1e-4)
    assert jnp.allclose(z, z_ref, atol=1e-4, rtol=1e-4)

    print("KERNEL_OK")
</pallas_src>

<mosaic_0001>
module attributes {stable_mosaic.version = 11 : i64} {
  func.func @ae_kernel(%arg0: i32, %arg1: memref<256x64xf32, #tpu.memory_space<vmem>>, %arg2: memref<64x128xbf16, #tpu.memory_space<vmem>>, %arg3: memref<1x128xf32, #tpu.memory_space<vmem>>, %arg4: memref<128x64xbf16, #tpu.memory_space<vmem>>, %arg5: memref<1x64xf32, #tpu.memory_space<vmem>>, %arg6: memref<64x128xbf16, #tpu.memory_space<vmem>>, %arg7: memref<1x128xf32, #tpu.memory_space<vmem>>, %arg8: memref<128x64xbf16, #tpu.memory_space<vmem>>, %arg9: memref<1x64xf32, #tpu.memory_space<vmem>>, %arg10: memref<64x128xbf16, #tpu.memory_space<vmem>>, %arg11: memref<1x128xf32, #tpu.memory_space<vmem>>, %arg12: memref<128x128xbf16, #tpu.memory_space<vmem>>, %arg13: memref<1x128xf32, #tpu.memory_space<vmem>>, %arg14: memref<256x128xf32, #tpu.memory_space<vmem>>, %arg15: memref<256x128xf32, #tpu.memory_space<vmem>>) attributes {dimension_semantics = [#tpu.dimension_semantics<parallel>], iteration_bounds = array<i64: 1>, scalar_prefetch = 0 : i64, scratch_operands = 0 : i64, tpu.core_type = #tpu.core_type<tc>, window_params = [{transform_indices = @transform_0, window_bounds = array<i64: 256, 64>}, {pipeline_mode = #tpu.pipeline_mode<synchronous>, transform_indices = @transform_1, window_bounds = array<i64: 64, 128>}, {pipeline_mode = #tpu.pipeline_mode<synchronous>, transform_indices = @transform_2, window_bounds = array<i64: 1, 128>}, {pipeline_mode = #tpu.pipeline_mode<synchronous>, transform_indices = @transform_3, window_bounds = array<i64: 128, 64>}, {pipeline_mode = #tpu.pipeline_mode<synchronous>, transform_indices = @transform_4, window_bounds = array<i64: 1, 64>}, {pipeline_mode = #tpu.pipeline_mode<synchronous>, transform_indices = @transform_5, window_bounds = array<i64: 64, 128>}, {pipeline_mode = #tpu.pipeline_mode<synchronous>, transform_indices = @transform_6, window_bounds = array<i64: 1, 128>}, {pipeline_mode = #tpu.pipeline_mode<synchronous>, transform_indices = @transform_7, window_bounds = array<i64: 128, 64>}, {pipeline_mode = #tpu.pipeline_mode<synchronous>, transform_indices = @transform_8, window_bounds = array<i64: 1, 64>}, {pipeline_mode = #tpu.pipeline_mode<synchronous>, transform_indices = @transform_9, window_bounds = array<i64: 64, 128>}, {pipeline_mode = #tpu.pipeline_mode<synchronous>, transform_indices = @transform_10, window_bounds = array<i64: 1, 128>}, {pipeline_mode = #tpu.pipeline_mode<synchronous>, transform_indices = @transform_11, window_bounds = array<i64: 128, 128>}, {pipeline_mode = #tpu.pipeline_mode<synchronous>, transform_indices = @transform_12, window_bounds = array<i64: 1, 128>}, {transform_indices = @transform_13, window_bounds = array<i64: 256, 128>}, {transform_indices = @transform_14, window_bounds = array<i64: 256, 128>}]} {
    %c0 = arith.constant 0 : index
    %c0_0 = arith.constant 0 : index
    %0 = vector.load %arg1[%c0, %c0_0] : memref<256x64xf32, #tpu.memory_space<vmem>>, vector<256x64xf32>
    %1 = vector.extract_strided_slice %0 {offsets = [0, 0], sizes = [128, 64], strides = [1, 1]} : vector<256x64xf32> to vector<128x64xf32>
    %2 = vector.extract_strided_slice %0 {offsets = [128, 0], sizes = [128, 64], strides = [1, 1]} : vector<256x64xf32> to vector<128x64xf32>
    %3 = arith.truncf %1 : vector<128x64xf32> to vector<128x64xbf16>
    %c0_1 = arith.constant 0 : index
    %c0_2 = arith.constant 0 : index
    %4 = vector.load %arg2[%c0_1, %c0_2] : memref<64x128xbf16, #tpu.memory_space<vmem>>, vector<64x128xbf16>
    %cst = arith.constant dense<0.000000e+00> : vector<128x128xf32>
    %5 = tpu.matmul %3, %4, %cst {dimension_numbers = #tpu.dot_dimension_numbers<[1], [0], [0], [1], [0, 0, 1, 1], [], []>} : vector<128x64xbf16>, vector<64x128xbf16>, vector<128x128xf32> -> vector<128x128xf32>
    %c0_3 = arith.constant 0 : index
    %c0_4 = arith.constant 0 : index
    %6 = vector.load %arg3[%c0_3, %c0_4] : memref<1x128xf32, #tpu.memory_space<vmem>>, vector<1x128xf32>
    %7 = vector.broadcast %6 : vector<1x128xf32> to vector<128x128xf32>
    %8 = arith.addf %5, %7 : vector<128x128xf32>
    %cst_5 = arith.constant 0.000000e+00 : f32
    %9 = vector.broadcast %cst_5 : f32 to vector<128x128xf32>
    %10 = arith.maximumf %8, %9 : vector<128x128xf32>
    %11 = arith.truncf %2 : vector<128x64xf32> to vector<128x64xbf16>
    %c0_6 = arith.constant 0 : index
    %c0_7 = arith.constant 0 : index
    %12 = vector.load %arg2[%c0_6, %c0_7] : memref<64x128xbf16, #tpu.memory_space<vmem>>, vector<64x128xbf16>
    %cst_8 = arith.constant dense<0.000000e+00> : vector<128x128xf32>
    %13 = tpu.matmul %11, %12, %cst_8 {dimension_numbers = #tpu.dot_dimension_numbers<[1], [0], [0], [1], [0, 0, 1, 1], [], []>} : vector<128x64xbf16>, vector<64x128xbf16>, vector<128x128xf32> -> vector<128x128xf32>
    %c0_9 = arith.constant 0 : index
    %c0_10 = arith.constant 0 : index
    %14 = vector.load %arg3[%c0_9, %c0_10] : memref<1x128xf32, #tpu.memory_space<vmem>>, vector<1x128xf32>
    %15 = vector.broadcast %14 : vector<1x128xf32> to vector<128x128xf32>
    %16 = arith.addf %13, %15 : vector<128x128xf32>
    %cst_11 = arith.constant 0.000000e+00 : f32
    %17 = vector.broadcast %cst_11 : f32 to vector<128x128xf32>
    %18 = arith.maximumf %16, %17 : vector<128x128xf32>
    %19 = arith.truncf %10 : vector<128x128xf32> to vector<128x128xbf16>
    %c0_12 = arith.constant 0 : index
    %c0_13 = arith.constant 0 : index
    %20 = vector.load %arg4[%c0_12, %c0_13] : memref<128x64xbf16, #tpu.memory_space<vmem>>, vector<128x64xbf16>
    %cst_14 = arith.constant dense<0.000000e+00> : vector<128x64xf32>
    %21 = tpu.matmul %19, %20, %cst_14 {dimension_numbers = #tpu.dot_dimension_numbers<[1], [0], [0], [1], [0, 0, 1, 1], [], []>} : vector<128x128xbf16>, vector<128x64xbf16>, vector<128x64xf32> -> vector<128x64xf32>
    %c0_15 = arith.constant 0 : index
    %c0_16 = arith.constant 0 : index
    %22 = vector.load %arg5[%c0_15, %c0_16] : memref<1x64xf32, #tpu.memory_space<vmem>>, vector<1x64xf32>
    %23 = vector.broadcast %22 : vector<1x64xf32> to vector<128x64xf32>
    %24 = arith.addf %21, %23 : vector<128x64xf32>
    %cst_17 = arith.constant 0.000000e+00 : f32
    %25 = vector.broadcast %cst_17 : f32 to vector<128x64xf32>
    %26 = arith.maximumf %24, %25 : vector<128x64xf32>
    %27 = arith.truncf %18 : vector<128x128xf32> to vector<128x128xbf16>
    %c0_18 = arith.constant 0 : index
    %c0_19 = arith.constant 0 : index
    %28 = vector.load %arg4[%c0_18, %c0_19] : memref<128x64xbf16, #tpu.memory_space<vmem>>, vector<128x64xbf16>
    %cst_20 = arith.constant dense<0.000000e+00> : vector<128x64xf32>
    %29 = tpu.matmul %27, %28, %cst_20 {dimension_numbers = #tpu.dot_dimension_numbers<[1], [0], [0], [1], [0, 0, 1, 1], [], []>} : vector<128x128xbf16>, vector<128x64xbf16>, vector<128x64xf32> -> vector<128x64xf32>
    %c0_21 = arith.constant 0 : index
    %c0_22 = arith.constant 0 : index
    %30 = vector.load %arg5[%c0_21, %c0_22] : memref<1x64xf32, #tpu.memory_space<vmem>>, vector<1x64xf32>
    %31 = vector.broadcast %30 : vector<1x64xf32> to vector<128x64xf32>
    %32 = arith.addf %29, %31 : vector<128x64xf32>
    %cst_23 = arith.constant 0.000000e+00 : f32
    %33 = vector.broadcast %cst_23 : f32 to vector<128x64xf32>
    %34 = arith.maximumf %32, %33 : vector<128x64xf32>
    %35 = arith.truncf %26 : vector<128x64xf32> to vector<128x64xbf16>
    %c0_24 = arith.constant 0 : index
    %c0_25 = arith.constant 0 : index
    %36 = vector.load %arg6[%c0_24, %c0_25] : memref<64x128xbf16, #tpu.memory_space<vmem>>, vector<64x128xbf16>
    %cst_26 = arith.constant dense<0.000000e+00> : vector<128x128xf32>
    %37 = tpu.matmul %35, %36, %cst_26 {dimension_numbers = #tpu.dot_dimension_numbers<[1], [0], [0], [1], [0, 0, 1, 1], [], []>} : vector<128x64xbf16>, vector<64x128xbf16>, vector<128x128xf32> -> vector<128x128xf32>
    %c0_27 = arith.constant 0 : index
    %c0_28 = arith.constant 0 : index
    %38 = vector.load %arg7[%c0_27, %c0_28] : memref<1x128xf32, #tpu.memory_space<vmem>>, vector<1x128xf32>
    %39 = vector.broadcast %38 : vector<1x128xf32> to vector<128x128xf32>
    %40 = arith.addf %37, %39 : vector<128x128xf32>
    %41 = arith.truncf %34 : vector<128x64xf32> to vector<128x64xbf16>
    %c0_29 = arith.constant 0 : index
    %c0_30 = arith.constant 0 : index
    %42 = vector.load %arg6[%c0_29, %c0_30] : memref<64x128xbf16, #tpu.memory_space<vmem>>, vector<64x128xbf16>
    %cst_31 = arith.constant dense<0.000000e+00> : vector<128x128xf32>
    %43 = tpu.matmul %41, %42, %cst_31 {dimension_numbers = #tpu.dot_dimension_numbers<[1], [0], [0], [1], [0, 0, 1, 1], [], []>} : vector<128x64xbf16>, vector<64x128xbf16>, vector<128x128xf32> -> vector<128x128xf32>
    %c0_32 = arith.constant 0 : index
    %c0_33 = arith.constant 0 : index
    %44 = vector.load %arg7[%c0_32, %c0_33] : memref<1x128xf32, #tpu.memory_space<vmem>>, vector<1x128xf32>
    %45 = vector.broadcast %44 : vector<1x128xf32> to vector<128x128xf32>
    %46 = arith.addf %43, %45 : vector<128x128xf32>
    %c0_34 = arith.constant 0 : index
    %c0_35 = arith.constant 0 : index
    %47 = vector.load %arg15[%c0_34, %c0_35] : memref<256x128xf32, #tpu.memory_space<vmem>>, vector<128x128xf32>
    tpu.vector_store %arg15[%c0_34, %c0_35], %40 {strides = array<i32>} : memref<256x128xf32, #tpu.memory_space<vmem>>, vector<128x128xf32>,
    %c128 = arith.constant 128 : index
    %c0_36 = arith.constant 0 : index
    %48 = vector.load %arg15[%c128, %c0_36] : memref<256x128xf32, #tpu.memory_space<vmem>>, vector<128x128xf32>
    tpu.vector_store %arg15[%c128, %c0_36], %46 {strides = array<i32>} : memref<256x128xf32, #tpu.memory_space<vmem>>, vector<128x128xf32>,
    %49 = arith.truncf %40 : vector<128x128xf32> to vector<128x128xbf16>
    %c0_37 = arith.constant 0 : index
    %c0_38 = arith.constant 0 : index
    %50 = vector.load %arg8[%c0_37, %c0_38] : memref<128x64xbf16, #tpu.memory_space<vmem>>, vector<128x64xbf16>
    %cst_39 = arith.constant dense<0.000000e+00> : vector<128x64xf32>
    %51 = tpu.matmul %49, %50, %cst_39 {dimension_numbers = #tpu.dot_dimension_numbers<[1], [0], [0], [1], [0, 0, 1, 1], [], []>} : vector<128x128xbf16>, vector<128x64xbf16>, vector<128x64xf32> -> vector<128x64xf32>
    %c0_40 = arith.constant 0 : index
    %c0_41 = arith.constant 0 : index
    %52 = vector.load %arg9[%c0_40, %c0_41] : memref<1x64xf32, #tpu.memory_space<vmem>>, vector<1x64xf32>
    %53 = vector.broadcast %52 : vector<1x64xf32> to vector<128x64xf32>
    %54 = arith.addf %51, %53 : vector<128x64xf32>
    %cst_42 = arith.constant 0.000000e+00 : f32
    %55 = vector.broadcast %cst_42 : f32 to vector<128x64xf32>
    %56 = arith.maximumf %54, %55 : vector<128x64xf32>
    %57 = arith.truncf %46 : vector<128x128xf32> to vector<128x128xbf16>
    %c0_43 = arith.constant 0 : index
    %c0_44 = arith.constant 0 : index
    %58 = vector.load %arg8[%c0_43, %c0_44] : memref<128x64xbf16, #tpu.memory_space<vmem>>, vector<128x64xbf16>
    %cst_45 = arith.constant dense<0.000000e+00> : vector<128x64xf32>
    %59 = tpu.matmul %57, %58, %cst_45 {dimension_numbers = #tpu.dot_dimension_numbers<[1], [0], [0], [1], [0, 0, 1, 1], [], []>} : vector<128x128xbf16>, vector<128x64xbf16>, vector<128x64xf32> -> vector<128x64xf32>
    %c0_46 = arith.constant 0 : index
    %c0_47 = arith.constant 0 : index
    %60 = vector.load %arg9[%c0_46, %c0_47] : memref<1x64xf32, #tpu.memory_space<vmem>>, vector<1x64xf32>
    %61 = vector.broadcast %60 : vector<1x64xf32> to vector<128x64xf32>
    %62 = arith.addf %59, %61 : vector<128x64xf32>
    %cst_48 = arith.constant 0.000000e+00 : f32
    %63 = vector.broadcast %cst_48 : f32 to vector<128x64xf32>
    %64 = arith.maximumf %62, %63 : vector<128x64xf32>
    %65 = arith.truncf %56 : vector<128x64xf32> to vector<128x64xbf16>
    %c0_49 = arith.constant 0 : index
    %c0_50 = arith.constant 0 : index
    %66 = vector.load %arg10[%c0_49, %c0_50] : memref<64x128xbf16, #tpu.memory_space<vmem>>, vector<64x128xbf16>
    %cst_51 = arith.constant dense<0.000000e+00> : vector<128x128xf32>
    %67 = tpu.matmul %65, %66, %cst_51 {dimension_numbers = #tpu.dot_dimension_numbers<[1], [0], [0], [1], [0, 0, 1, 1], [], []>} : vector<128x64xbf16>, vector<64x128xbf16>, vector<128x128xf32> -> vector<128x128xf32>
    %c0_52 = arith.constant 0 : index
    %c0_53 = arith.constant 0 : index
    %68 = vector.load %arg11[%c0_52, %c0_53] : memref<1x128xf32, #tpu.memory_space<vmem>>, vector<1x128xf32>
    %69 = vector.broadcast %68 : vector<1x128xf32> to vector<128x128xf32>
    %70 = arith.addf %67, %69 : vector<128x128xf32>
    %cst_54 = arith.constant 0.000000e+00 : f32
    %71 = vector.broadcast %cst_54 : f32 to vector<128x128xf32>
    %72 = arith.maximumf %70, %71 : vector<128x128xf32>
    %73 = arith.truncf %64 : vector<128x64xf32> to vector<128x64xbf16>
    %c0_55 = arith.constant 0 : index
    %c0_56 = arith.constant 0 : index
    %74 = vector.load %arg10[%c0_55, %c0_56] : memref<64x128xbf16, #tpu.memory_space<vmem>>, vector<64x128xbf16>
    %cst_57 = arith.constant dense<0.000000e+00> : vector<128x128xf32>
    %75 = tpu.matmul %73, %74, %cst_57 {dimension_numbers = #tpu.dot_dimension_numbers<[1], [0], [0], [1], [0, 0, 1, 1], [], []>} : vector<128x64xbf16>, vector<64x128xbf16>, vector<128x128xf32> -> vector<128x128xf32>
    %c0_58 = arith.constant 0 : index
    %c0_59 = arith.constant 0 : index
    %76 = vector.load %arg11[%c0_58, %c0_59] : memref<1x128xf32, #tpu.memory_space<vmem>>, vector<1x128xf32>
    %77 = vector.broadcast %76 : vector<1x128xf32> to vector<128x128xf32>
    %78 = arith.addf %75, %77 : vector<128x128xf32>
    %cst_60 = arith.constant 0.000000e+00 : f32
    %79 = vector.broadcast %cst_60 : f32 to vector<128x128xf32>
    %80 = arith.maximumf %78, %79 : vector<128x128xf32>
    %81 = arith.truncf %72 : vector<128x128xf32> to vector<128x128xbf16>
    %c0_61 = arith.constant 0 : index
    %c0_62 = arith.constant 0 : index
    %82 = vector.load %arg12[%c0_61, %c0_62] : memref<128x128xbf16, #tpu.memory_space<vmem>>, vector<128x128xbf16>
    %cst_63 = arith.constant dense<0.000000e+00> : vector<128x128xf32>
    %83 = tpu.matmul %81, %82, %cst_63 {dimension_numbers = #tpu.dot_dimension_numbers<[1], [0], [0], [1], [0, 0, 1, 1], [], []>} : vector<128x128xbf16>, vector<128x128xbf16>, vector<128x128xf32> -> vector<128x128xf32>
    %c0_64 = arith.constant 0 : index
    %c0_65 = arith.constant 0 : index
    %84 = vector.load %arg13[%c0_64, %c0_65] : memref<1x128xf32, #tpu.memory_space<vmem>>, vector<1x128xf32>
    %85 = vector.broadcast %84 : vector<1x128xf32> to vector<128x128xf32>
    %86 = arith.addf %83, %85 : vector<128x128xf32>
    %c0_66 = arith.constant 0 : index
    %c0_67 = arith.constant 0 : index
    %87 = vector.load %arg14[%c0_66, %c0_67] : memref<256x128xf32, #tpu.memory_space<vmem>>, vector<128x128xf32>
    tpu.vector_store %arg14[%c0_66, %c0_67], %86 {strides = array<i32>} : memref<256x128xf32, #tpu.memory_space<vmem>>, vector<128x128xf32>,
    %88 = arith.truncf %80 : vector<128x128xf32> to vector<128x128xbf16>
    %c0_68 = arith.constant 0 : index
    %c0_69 = arith.constant 0 : index
    %89 = vector.load %arg12[%c0_68, %c0_69] : memref<128x128xbf16, #tpu.memory_space<vmem>>, vector<128x128xbf16>
    %cst_70 = arith.constant dense<0.000000e+00> : vector<128x128xf32>
    %90 = tpu.matmul %88, %89, %cst_70 {dimension_numbers = #tpu.dot_dimension_numbers<[1], [0], [0], [1], [0, 0, 1, 1], [], []>} : vector<128x128xbf16>, vector<128x128xbf16>, vector<128x128xf32> -> vector<128x128xf32>
    %c0_71 = arith.constant 0 : index
    %c0_72 = arith.constant 0 : index
    %91 = vector.load %arg13[%c0_71, %c0_72] : memref<1x128xf32, #tpu.memory_space<vmem>>, vector<1x128xf32>
    %92 = vector.broadcast %91 : vector<1x128xf32> to vector<128x128xf32>
    %93 = arith.addf %90, %92 : vector<128x128xf32>
    %c128_73 = arith.constant 128 : index
    %c0_74 = arith.constant 0 : index
    %94 = vector.load %arg14[%c128_73, %c0_74] : memref<256x128xf32, #tpu.memory_space<vmem>>, vector<128x128xf32>
    tpu.vector_store %arg14[%c128_73, %c0_74], %93 {strides = array<i32>} : memref<256x128xf32, #tpu.memory_space<vmem>>, vector<128x128xf32>,
    return
  }
  func.func @transform_0(%arg0: i32) -> (i32, i32) {
    %c0_i32 = arith.constant 0 : i32
    %c0_i32_0 = arith.constant 0 : i32
    return %arg0, %c0_i32 : i32, i32
  }
  func.func @transform_1(%arg0: i32) -> (i32, i32) {
    %c0_i32 = arith.constant 0 : i32
    %c0_i32_0 = arith.constant 0 : i32
    %c0_i32_1 = arith.constant 0 : i32
    return %c0_i32, %c0_i32_0 : i32, i32
  }
  func.func @transform_2(%arg0: i32) -> (i32, i32) {
    %c0_i32 = arith.constant 0 : i32
    %c0_i32_0 = arith.constant 0 : i32
    %c0_i32_1 = arith.constant 0 : i32
    return %c0_i32, %c0_i32_0 : i32, i32
  }
  func.func @transform_3(%arg0: i32) -> (i32, i32) {
    %c0_i32 = arith.constant 0 : i32
    %c0_i32_0 = arith.constant 0 : i32
    %c0_i32_1 = arith.constant 0 : i32
    return %c0_i32, %c0_i32_0 : i32, i32
  }
  func.func @transform_4(%arg0: i32) -> (i32, i32) {
    %c0_i32 = arith.constant 0 : i32
    %c0_i32_0 = arith.constant 0 : i32
    %c0_i32_1 = arith.constant 0 : i32
    return %c0_i32, %c0_i32_0 : i32, i32
  }
  func.func @transform_5(%arg0: i32) -> (i32, i32) {
    %c0_i32 = arith.constant 0 : i32
    %c0_i32_0 = arith.constant 0 : i32
    %c0_i32_1 = arith.constant 0 : i32
    return %c0_i32, %c0_i32_0 : i32, i32
  }
  func.func @transform_6(%arg0: i32) -> (i32, i32) {
    %c0_i32 = arith.constant 0 : i32
    %c0_i32_0 = arith.constant 0 : i32
    %c0_i32_1 = arith.constant 0 : i32
    return %c0_i32, %c0_i32_0 : i32, i32
  }
  func.func @transform_7(%arg0: i32) -> (i32, i32) {
    %c0_i32 = arith.constant 0 : i32
    %c0_i32_0 = arith.constant 0 : i32
    %c0_i32_1 = arith.constant 0 : i32
    return %c0_i32, %c0_i32_0 : i32, i32
  }
  func.func @transform_8(%arg0: i32) -> (i32, i32) {
    %c0_i32 = arith.constant 0 : i32
    %c0_i32_0 = arith.constant 0 : i32
    %c0_i32_1 = arith.constant 0 : i32
    return %c0_i32, %c0_i32_0 : i32, i32
  }
  func.func @transform_9(%arg0: i32) -> (i32, i32) {
    %c0_i32 = arith.constant 0 : i32
    %c0_i32_0 = arith.constant 0 : i32
    %c0_i32_1 = arith.constant 0 : i32
    return %c0_i32, %c0_i32_0 : i32, i32
  }
  func.func @transform_10(%arg0: i32) -> (i32, i32) {
    %c0_i32 = arith.constant 0 : i32
    %c0_i32_0 = arith.constant 0 : i32
    %c0_i32_1 = arith.constant 0 : i32
    return %c0_i32, %c0_i32_0 : i32, i32
  }
  func.func @transform_11(%arg0: i32) -> (i32, i32) {
    %c0_i32 = arith.constant 0 : i32
    %c0_i32_0 = arith.constant 0 : i32
    %c0_i32_1 = arith.constant 0 : i32
    return %c0_i32, %c0_i32_0 : i32, i32
  }
  func.func @transform_12(%arg0: i32) -> (i32, i32) {
    %c0_i32 = arith.constant 0 : i32
    %c0_i32_0 = arith.constant 0 : i32
    %c0_i32_1 = arith.constant 0 : i32
    return %c0_i32, %c0_i32_0 : i32, i32
  }
  func.func @transform_13(%arg0: i32) -> (i32, i32) {
    %c0_i32 = arith.constant 0 : i32
    %c0_i32_0 = arith.constant 0 : i32
    return %arg0, %c0_i32 : i32, i32
  }
  func.func @transform_14(%arg0: i32) -> (i32, i32) {
    %c0_i32 = arith.constant 0 : i32
    %c0_i32_0 = arith.constant 0 : i32
    return %arg0, %c0_i32 : i32, i32
  }
}

</mosaic_0001>

<llo_original>
// kernel: _ae_forward_impl.1
$region0: #{_ae_forward_impl.1}
  #allocation0 [shape = 'u32[]', space=smem, size = 0x4, offset = 0x4, fixed_abs, tag = 'smem constant byte address 0x4 - core index']
  #allocation1 [shape = 'u32[72,128]{1,0:T(1,128)}', space=vmem, size = 0x9000, scoped, tag = 'internal scratch']
  %s0 = inlined_call_operand.vmem [shape: f32[256,64], index: 0, kind: input, shape index: {}]
  %s1 = inlined_call_operand.vmem [shape: bf16[64,128], index: 1, kind: input, shape index: {}]
  %s2 = inlined_call_operand.vmem [shape: f32[1,128], index: 2, kind: input, shape index: {}]
  %s3 = inlined_call_operand.vmem [shape: bf16[128,64], index: 3, kind: input, shape index: {}]
  %s4 = inlined_call_operand.vmem [shape: f32[1,64], index: 4, kind: input, shape index: {}]
  %s5 = inlined_call_operand.vmem [shape: bf16[64,128], index: 5, kind: input, shape index: {}]
  %s6 = inlined_call_operand.vmem [shape: f32[1,128], index: 6, kind: input, shape index: {}]
  %s7 = inlined_call_operand.vmem [shape: bf16[128,64], index: 7, kind: input, shape index: {}]
  %s8 = inlined_call_operand.vmem [shape: f32[1,64], index: 8, kind: input, shape index: {}]
  %s9 = inlined_call_operand.vmem [shape: bf16[64,128], index: 9, kind: input, shape index: {}]
  %s10 = inlined_call_operand.vmem [shape: f32[1,128], index: 10, kind: input, shape index: {}]
  %s11 = inlined_call_operand.vmem [shape: bf16[128,128], index: 11, kind: input, shape index: {}]
  %s12 = inlined_call_operand.vmem [shape: f32[1,128], index: 12, kind: input, shape index: {}]
  %s13 = inlined_call_operand.vmem [shape: f32[256,128], index: 13, kind: output, shape index: {0}]
  %s14 = inlined_call_operand.vmem [shape: f32[256,128], index: 14, kind: output, shape index: {1}]
  %15 = xla_tuple %s13, %s14
  %s16 = sld [smem:[#allocation0]]
  $region70: #{_ae_forward_impl.1} parent=0
    _
  %s18 = ssub.s32 1, %s16
  %s19 = scalar_select 0, %s18, %s16
  // Predicated region
  $region2: #{_ae_forward_impl.1} parent=0 // pred_check
    _
  $region3: #{_ae_forward_impl.1} parent=0 // pred_check_branch
    %21 = sbr.rel (0) target = $region5
  $region4: #{_ae_forward_impl.1} parent=0 // pred_region
    _
  $region5: #{_ae_forward_impl.1} parent=0 // pred_fallthru
    _
  // Predicated region
  $region6: #{_ae_forward_impl.1} parent=0 // pred_check
    _
  $region7: #{_ae_forward_impl.1} parent=0 // pred_check_branch
    %23 = sbr.rel (0) target = $region9
  $region8: #{_ae_forward_impl.1} parent=0 // pred_region
    _
  $region9: #{_ae_forward_impl.1} parent=0 // pred_fallthru
    _
  // Predicated region
  $region10: #{_ae_forward_impl.1} parent=0 // pred_check
    _
  $region11: #{_ae_forward_impl.1} parent=0 // pred_check_branch
    %25 = sbr.rel (0) target = $region13
  $region12: #{_ae_forward_impl.1} parent=0 // pred_region
    _
  $region13: #{_ae_forward_impl.1} parent=0 // pred_fallthru
    _
  // Predicated region
  $region14: #{_ae_forward_impl.1} parent=0 // pred_check
    _
  $region15: #{_ae_forward_impl.1} parent=0 // pred_check_branch
    %27 = sbr.rel (0) target = $region17
  $region16: #{_ae_forward_impl.1} parent=0 // pred_region
    _
  $region17: #{_ae_forward_impl.1} parent=0 // pred_fallthru
    _
  // Predicated region
  $region18: #{_ae_forward_impl.1} parent=0 // pred_check
    _
  $region19: #{_ae_forward_impl.1} parent=0 // pred_check_branch
    %29 = sbr.rel (0) target = $region21
  $region20: #{_ae_forward_impl.1} parent=0 // pred_region
    _
  $region21: #{_ae_forward_impl.1} parent=0 // pred_fallthru
    _
  // Predicated region
  $region22: #{_ae_forward_impl.1} parent=0 // pred_check
    _
  $region23: #{_ae_forward_impl.1} parent=0 // pred_check_branch
    %31 = sbr.rel (0) target = $region25
  $region24: #{_ae_forward_impl.1} parent=0 // pred_region
    _
  $region25: #{_ae_forward_impl.1} parent=0 // pred_fallthru
    _
  // Predicated region
  $region26: #{_ae_forward_impl.1} parent=0 // pred_check
    _
  $region27: #{_ae_forward_impl.1} parent=0 // pred_check_branch
    %33 = sbr.rel (0) target = $region29
  $region28: #{_ae_forward_impl.1} parent=0 // pred_region
    _
  $region29: #{_ae_forward_impl.1} parent=0 // pred_fallthru
    _
  // Predicated region
  $region30: #{_ae_forward_impl.1} parent=0 // pred_check
    _
  $region31: #{_ae_forward_impl.1} parent=0 // pred_check_branch
    %35 = sbr.rel (0) target = $region33
  $region32: #{_ae_forward_impl.1} parent=0 // pred_region
    _
  $region33: #{_ae_forward_impl.1} parent=0 // pred_fallthru
    _
  // Predicated region
  $region34: #{_ae_forward_impl.1} parent=0 // pred_check
    _
  $region35: #{_ae_forward_impl.1} parent=0 // pred_check_branch
    %37 = sbr.rel (0) target = $region37
  $region36: #{_ae_forward_impl.1} parent=0 // pred_region
    _
  $region37: #{_ae_forward_impl.1} parent=0 // pred_fallthru
    _
  // Predicated region
  $region38: #{_ae_forward_impl.1} parent=0 // pred_check
    _
  $region39: #{_ae_forward_impl.1} parent=0 // pred_check_branch
    %39 = sbr.rel (0) target = $region41
  $region40: #{_ae_forward_impl.1} parent=0 // pred_region
    _
  $region41: #{_ae_forward_impl.1} parent=0 // pred_fallthru
    _
  // Predicated region
  $region42: #{_ae_forward_impl.1} parent=0 // pred_check
    _
  $region43: #{_ae_forward_impl.1} parent=0 // pred_check_branch
    %41 = sbr.rel (0) target = $region45
  $region44: #{_ae_forward_impl.1} parent=0 // pred_region
    _
  $region45: #{_ae_forward_impl.1} parent=0 // pred_fallthru
    _
  // Predicated region
  $region46: #{_ae_forward_impl.1} parent=0 // pred_check
    _
  $region47: #{_ae_forward_impl.1} parent=0 // pred_check_branch
    %43 = sbr.rel (0) target = $region49
  $region48: #{_ae_forward_impl.1} parent=0 // pred_region
    _
  $region49: #{_ae_forward_impl.1} parent=0 // pred_fallthru
    _
  // Predicated region
  $region50: #{_ae_forward_impl.1} parent=0 // pred_check
    _
  $region51: #{_ae_forward_impl.1} parent=0 // pred_check_branch
    %45 = sbr.rel (0) target = $region53
  $region52: #{_ae_forward_impl.1} parent=0 // pred_region
    _
  $region53: #{_ae_forward_impl.1} parent=0 // pred_fallthru
    _
  %v47 = vld [vmem:[%s0] sm:$0xff]
  %v48 = vld [vmem:[%s0 + $0x8] sm:$0xff]
  %v49 = vld [vmem:[%s0 + $0x10] sm:$0xff]
  %v50 = vld [vmem:[%s0 + $0x18] sm:$0xff]
  %v51 = vld [vmem:[%s0 + $0x20] sm:$0xff]
  %v52 = vld [vmem:[%s0 + $0x28] sm:$0xff]
  %v53 = vld [vmem:[%s0 + $0x30] sm:$0xff]
  %v54 = vld [vmem:[%s0 + $0x38] sm:$0xff]
  %v55 = vld [vmem:[%s0 + $0x40] sm:$0xff]
  %v56 = vld [vmem:[%s0 + $0x48] sm:$0xff]
  %v57 = vld [vmem:[%s0 + $0x50] sm:$0xff]
  %v58 = vld [vmem:[%s0 + $0x58] sm:$0xff]
  %v59 = vld [vmem:[%s0 + $0x60] sm:$0xff]
  %v60 = vld [vmem:[%s0 + $0x68] sm:$0xff]
  %v61 = vld [vmem:[%s0 + $0x70] sm:$0xff]
  %v62 = vld [vmem:[%s0 + $0x78] sm:$0xff]
  %v63 = vld [vmem:[%s0 + $0x80] sm:$0xff]
  %v64 = vld [vmem:[%s0 + $0x88] sm:$0xff]
  %v65 = vld [vmem:[%s0 + $0x90] sm:$0xff]
  %v66 = vld [vmem:[%s0 + $0x98] sm:$0xff]
  %v67 = vld [vmem:[%s0 + $0xa0] sm:$0xff]
  %v68 = vld [vmem:[%s0 + $0xa8] sm:$0xff]
  %v69 = vld [vmem:[%s0 + $0xb0] sm:$0xff]
  %v70 = vld [vmem:[%s0 + $0xb8] sm:$0xff]
  %v71 = vld [vmem:[%s0 + $0xc0] sm:$0xff]
  %v72 = vld [vmem:[%s0 + $0xc8] sm:$0xff]
  %v73 = vld [vmem:[%s0 + $0xd0] sm:$0xff]
  %v74 = vld [vmem:[%s0 + $0xd8] sm:$0xff]
  %v75 = vld [vmem:[%s0 + $0xe0] sm:$0xff]
  %v76 = vld [vmem:[%s0 + $0xe8] sm:$0xff]
  %v77 = vld [vmem:[%s0 + $0xf0] sm:$0xff]
  %v78 = vld [vmem:[%s0 + $0xf8] sm:$0xff]
  %v79 = vpack.c.bf16 %v48, %v47
  %v80 = vpack.c.bf16 %v50, %v49
  %v81 = vpack.c.bf16 %v52, %v51
  %v82 = vpack.c.bf16 %v54, %v53
  %v83 = vpack.c.bf16 %v56, %v55
  %v84 = vpack.c.bf16 %v58, %v57
  %v85 = vpack.c.bf16 %v60, %v59
  %v86 = vpack.c.bf16 %v62, %v61
  %v87 = vld [vmem:[%s1] sm:$0xf]
  %v88 = vld [vmem:[%s1 + $0x4] sm:$0xf]
  %v89 = vld [vmem:[%s1 + $0x8] sm:$0xf]
  %v90 = vld [vmem:[%s1 + $0xc] sm:$0xf]
  %v91 = vld [vmem:[%s1 + $0x10] sm:$0xf]
  %v92 = vld [vmem:[%s1 + $0x14] sm:$0xf]
  %v93 = vld [vmem:[%s1 + $0x18] sm:$0xf]
  %v94 = vld [vmem:[%s1 + $0x1c] sm:$0xf]
  %v95 = vld [vmem:[%s2] sm:$0x1]
  %v97 = vperm.slane %v95, 0
  %v107 = vunpack.c.l.b16 %v87
  %v108 = vunpack.c.l.b16 %v88
  %v109 = vunpack.c.l.b16 %v89
  %v110 = vunpack.c.l.b16 %v90
  %v111 = vunpack.c.l.b16 %v91
  %v112 = vunpack.c.l.b16 %v92
  %v113 = vunpack.c.l.b16 %v93
  %v114 = vunpack.c.l.b16 %v94
  %v115 = vpack.c.b16 %v108, %v107
  %v116 = vpack.c.b16 %v110, %v109
  %v117 = vpack.c.b16 %v112, %v111
  %v118 = vpack.c.b16 %v114, %v113
  %vm123 = vcmask 523264
  %v125 = vsel %vm123, %v79, 0
  %v128 = vsel %vm123, %v80, 0
  %v131 = vsel %vm123, %v81, 0
  %v134 = vsel %vm123, %v82, 0
  %v137 = vsel %vm123, %v83, 0
  %v140 = vsel %vm123, %v84, 0
  %v143 = vsel %vm123, %v85, 0
  %v146 = vsel %vm123, %v86, 0
  %148 = vmatpush.bf16.msra.mxu0 0
  %149 = vmatpush.bf16.msra.mxu0 0
  %150 = vmatpush.bf16.msra.mxu0 0
  %151 = vmatpush.bf16.msra.mxu0 0
  %152 = vmatpush.bf16.msra.mxu0 %v118
  %153 = vmatpush.bf16.msra.mxu0 %v117
  %154 = vmatpush.bf16.msra.mxu0 %v116
  %155 = vmatpush.bf16.msra.mxu0 %v115
  %156 = vmatmul.bf16.gmra.mxu0 %v125
  %v157 = vpop.f32.mrf.mxu0
  %v158 = vadd.f32 %v97, %v157
  %v159 = vpop.f32.mrf.mxu0
  %v160 = vadd.f32 %v97, %v159
  %161 = vmatmul.bf16.gmra.mxu0 %v128
  %v162 = vpop.f32.mrf.mxu0
  %v163 = vadd.f32 %v97, %v162
  %v164 = vpop.f32.mrf.mxu0
  %v165 = vadd.f32 %v97, %v164
  %166 = vmatmul.bf16.gmra.mxu0 %v131
  %v167 = vpop.f32.mrf.mxu0
  %v168 = vadd.f32 %v97, %v167
  %v169 = vpop.f32.mrf.mxu0
  %v170 = vadd.f32 %v97, %v169
  %171 = vmatmul.bf16.gmra.mxu0 %v134
  %v172 = vpop.f32.mrf.mxu0
  %v173 = vadd.f32 %v97, %v172
  %v174 = vpop.f32.mrf.mxu0
  %v175 = vadd.f32 %v97, %v174
  %176 = vmatmul.bf16.gmra.mxu0 %v137
  %v177 = vpop.f32.mrf.mxu0
  %v178 = vadd.f32 %v97, %v177
  %v179 = vpop.f32.mrf.mxu0
  %v180 = vadd.f32 %v97, %v179
  %181 = vmatmul.bf16.gmra.mxu0 %v140
  %v182 = vpop.f32.mrf.mxu0
  %v183 = vadd.f32 %v97, %v182
  %v184 = vpop.f32.mrf.mxu0
  %v185 = vadd.f32 %v97, %v184
  %186 = vmatmul.bf16.gmra.mxu0 %v143
  %v187 = vpop.f32.mrf.mxu0
  %v188 = vadd.f32 %v97, %v187
  %v189 = vpop.f32.mrf.mxu0
  %v190 = vadd.f32 %v97, %v189
  %191 = vmatmul.bf16.gmra.mxu0 %v146
  %v192 = vpop.f32.mrf.mxu0
  %v193 = vadd.f32 %v97, %v192
  %v194 = vpop.f32.mrf.mxu0
  %v195 = vadd.f32 %v97, %v194
  %196 = vdwg.mxu0
  %v197 = vmax.f32 %v158, 0.0
  %v198 = vmax.f32 %v160, 0.0
  %v199 = vmax.f32 %v163, 0.0
  %v200 = vmax.f32 %v165, 0.0
  %v201 = vmax.f32 %v168, 0.0
  %v202 = vmax.f32 %v170, 0.0
  %v203 = vmax.f32 %v173, 0.0
  %v204 = vmax.f32 %v175, 0.0
  %v205 = vmax.f32 %v178, 0.0
  %v206 = vmax.f32 %v180, 0.0
  %v207 = vmax.f32 %v183, 0.0
  %v208 = vmax.f32 %v185, 0.0
  %v209 = vmax.f32 %v188, 0.0
  %v210 = vmax.f32 %v190, 0.0
  %v211 = vmax.f32 %v193, 0.0
  %v212 = vmax.f32 %v195, 0.0
  %v213 = vpack.c.bf16 %v64, %v63
  %v214 = vpack.c.bf16 %v66, %v65
  %v215 = vpack.c.bf16 %v68, %v67
  %v216 = vpack.c.bf16 %v70, %v69
  %v217 = vpack.c.bf16 %v72, %v71
  %v218 = vpack.c.bf16 %v74, %v73
  %v219 = vpack.c.bf16 %v76, %v75
  %v220 = vpack.c.bf16 %v78, %v77
  %v222 = vsel %vm123, %v213, 0
  %v225 = vsel %vm123, %v214, 0
  %v228 = vsel %vm123, %v215, 0
  %v231 = vsel %vm123, %v216, 0
  %v234 = vsel %vm123, %v217, 0
  %v237 = vsel %vm123, %v218, 0
  %v240 = vsel %vm123, %v219, 0
  %v243 = vsel %vm123, %v220, 0
  %245 = vmatpush.bf16.msra.mxu0 0
  %246 = vmatpush.bf16.msra.mxu0 0
  %247 = vmatpush.bf16.msra.mxu0 0
  %248 = vmatpush.bf16.msra.mxu0 0
  %249 = vmatpush.bf16.msra.mxu0 %v118
  %250 = vmatpush.bf16.msra.mxu0 %v117
  %251 = vmatpush.bf16.msra.mxu0 %v116
  %252 = vmatpush.bf16.msra.mxu0 %v115
  %253 = vmatmul.bf16.gmra.mxu0 %v222
  %v254 = vpop.f32.mrf.mxu0
  %v255 = vadd.f32 %v97, %v254
  %v256 = vpop.f32.mrf.mxu0
  %v257 = vadd.f32 %v97, %v256
  %258 = vmatmul.bf16.gmra.mxu0 %v225
  %v259 = vpop.f32.mrf.mxu0
  %v260 = vadd.f32 %v97, %v259
  %v261 = vpop.f32.mrf.mxu0
  %v262 = vadd.f32 %v97, %v261
  %263 = vmatmul.bf16.gmra.mxu0 %v228
  %v264 = vpop.f32.mrf.mxu0
  %v265 = vadd.f32 %v97, %v264
  %v266 = vpop.f32.mrf.mxu0
  %v267 = vadd.f32 %v97, %v266
  %268 = vmatmul.bf16.gmra.mxu0 %v231
  %v269 = vpop.f32.mrf.mxu0
  %v270 = vadd.f32 %v97, %v269
  %v271 = vpop.f32.mrf.mxu0
  %v272 = vadd.f32 %v97, %v271
  %273 = vmatmul.bf16.gmra.mxu0 %v234
  %v274 = vpop.f32.mrf.mxu0
  %v275 = vadd.f32 %v97, %v274
  %v276 = vpop.f32.mrf.mxu0
  %v277 = vadd.f32 %v97, %v276
  %278 = vmatmul.bf16.gmra.mxu0 %v237
  %v279 = vpop.f32.mrf.mxu0
  %v280 = vadd.f32 %v97, %v279
  %v281 = vpop.f32.mrf.mxu0
  %v282 = vadd.f32 %v97, %v281
  %283 = vmatmul.bf16.gmra.mxu0 %v240
  %v284 = vpop.f32.mrf.mxu0
  %v285 = vadd.f32 %v97, %v284
  %v286 = vpop.f32.mrf.mxu0
  %v287 = vadd.f32 %v97, %v286
  %288 = vmatmul.bf16.gmra.mxu0 %v243
  %v289 = vpop.f32.mrf.mxu0
  %v290 = vadd.f32 %v97, %v289
  %v291 = vpop.f32.mrf.mxu0
  %v292 = vadd.f32 %v97, %v291
  %293 = vdwg.mxu0
  %v294 = vmax.f32 %v255, 0.0
  %v295 = vmax.f32 %v257, 0.0
  %v296 = vmax.f32 %v260, 0.0
  %v297 = vmax.f32 %v262, 0.0
  %v298 = vmax.f32 %v265, 0.0
  %v299 = vmax.f32 %v267, 0.0
  %v300 = vmax.f32 %v270, 0.0
  %v301 = vmax.f32 %v272, 0.0
  %v302 = vmax.f32 %v275, 0.0
  %v303 = vmax.f32 %v277, 0.0
  %v304 = vmax.f32 %v280, 0.0
  %v305 = vmax.f32 %v282, 0.0
  %v306 = vmax.f32 %v285, 0.0
  %v307 = vmax.f32 %v287, 0.0
  %v308 = vmax.f32 %v290, 0.0
  %v309 = vmax.f32 %v292, 0.0
  %v310 = vpack.c.bf16 %v198, %v197
  %v311 = vpack.c.bf16 %v200, %v199
  %v312 = vpack.c.bf16 %v202, %v201
  %v313 = vpack.c.bf16 %v204, %v203
  %v314 = vpack.c.bf16 %v206, %v205
  %v315 = vpack.c.bf16 %v208, %v207
  %v316 = vpack.c.bf16 %v210, %v209
  %v317 = vpack.c.bf16 %v212, %v211
  %v318 = vld [vmem:[%s3] sm:$0xf]
  %v319 = vld [vmem:[%s3 + $0x4] sm:$0xf]
  %v320 = vld [vmem:[%s3 + $0x8] sm:$0xf]
  %v321 = vld [vmem:[%s3 + $0xc] sm:$0xf]
  %v322 = vld [vmem:[%s3 + $0x10] sm:$0xf]
  %v323 = vld [vmem:[%s3 + $0x14] sm:$0xf]
  %v324 = vld [vmem:[%s3 + $0x18] sm:$0xf]
  %v325 = vld [vmem:[%s3 + $0x1c] sm:$0xf]
  %v326 = vld [vmem:[%s3 + $0x20] sm:$0xf]
  %v327 = vld [vmem:[%s3 + $0x24] sm:$0xf]
  %v328 = vld [vmem:[%s3 + $0x28] sm:$0xf]
  %v329 = vld [vmem:[%s3 + $0x2c] sm:$0xf]
  %v330 = vld [vmem:[%s3 + $0x30] sm:$0xf]
  %v331 = vld [vmem:[%s3 + $0x34] sm:$0xf]
  %v332 = vld [vmem:[%s3 + $0x38] sm:$0xf]
  %v333 = vld [vmem:[%s3 + $0x3c] sm:$0xf]
  %v334 = vld [vmem:[%s4] sm:$0x1]
  %v336 = vperm.slane %v334, 0
  %v354 = vunpack.c.l.b16 %v318
  %v355 = vunpack.c.l.b16 %v319
  %v356 = vunpack.c.l.b16 %v320
  %v357 = vunpack.c.l.b16 %v321
  %v358 = vunpack.c.l.b16 %v322
  %v359 = vunpack.c.l.b16 %v323
  %v360 = vunpack.c.l.b16 %v324
  %v361 = vunpack.c.l.b16 %v325
  %v362 = vunpack.c.l.b16 %v326
  %v363 = vunpack.c.l.b16 %v327
  %v364 = vunpack.c.l.b16 %v328
  %v365 = vunpack.c.l.b16 %v329
  %v366 = vunpack.c.l.b16 %v330
  %v367 = vunpack.c.l.b16 %v331
  %v368 = vunpack.c.l.b16 %v332
  %v369 = vunpack.c.l.b16 %v333
  %v370 = vpack.c.b16 %v355, %v354
  %v371 = vpack.c.b16 %v357, %v356
  %v372 = vpack.c.b16 %v359, %v358
  %v373 = vpack.c.b16 %v361, %v360
  %v374 = vpack.c.b16 %v363, %v362
  %v375 = vpack.c.b16 %v365, %v364
  %v376 = vpack.c.b16 %v367, %v366
  %v377 = vpack.c.b16 %v369, %v368
  %386 = vmatpush.bf16.msra.mxu0 %v377
  %387 = vmatpush.bf16.msra.mxu0 %v376
  %388 = vmatpush.bf16.msra.mxu0 %v375
  %389 = vmatpush.bf16.msra.mxu0 %v374
  %390 = vmatpush.bf16.msra.mxu0 %v373
  %391 = vmatpush.bf16.msra.mxu0 %v372
  %392 = vmatpush.bf16.msra.mxu0 %v371
  %393 = vmatpush.bf16.msra.mxu0 %v370
  %394 = vmatmul.bf16.gmra.mxu0 %v310
  %v395 = vpop.f32.mrf.mxu0
  %v396 = vadd.f32 %v336, %v395
  %v397 = vpop.f32.mrf.mxu0
  %v398 = vadd.f32 %v336, %v397
  %399 = vmatmul.bf16.gmra.mxu0 %v311
  %v400 = vpop.f32.mrf.mxu0
  %v401 = vadd.f32 %v336, %v400
  %v402 = vpop.f32.mrf.mxu0
  %v403 = vadd.f32 %v336, %v402
  %404 = vmatmul.bf16.gmra.mxu0 %v312
  %v405 = vpop.f32.mrf.mxu0
  %v406 = vadd.f32 %v336, %v405
  %v407 = vpop.f32.mrf.mxu0
  %v408 = vadd.f32 %v336, %v407
  %409 = vmatmul.bf16.gmra.mxu0 %v313
  %v410 = vpop.f32.mrf.mxu0
  %v411 = vadd.f32 %v336, %v410
  %v412 = vpop.f32.mrf.mxu0
  %v413 = vadd.f32 %v336, %v412
  %414 = vmatmul.bf16.gmra.mxu0 %v314
  %v415 = vpop.f32.mrf.mxu0
  %v416 = vadd.f32 %v336, %v415
  %v417 = vpop.f32.mrf.mxu0
  %v418 = vadd.f32 %v336, %v417
  %419 = vmatmul.bf16.gmra.mxu0 %v315
  %v420 = vpop.f32.mrf.mxu0
  %v421 = vadd.f32 %v336, %v420
  %v422 = vpop.f32.mrf.mxu0
  %v423 = vadd.f32 %v336, %v422
  %424 = vmatmul.bf16.gmra.mxu0 %v316
  %v425 = vpop.f32.mrf.mxu0
  %v426 = vadd.f32 %v336, %v425
  %v427 = vpop.f32.mrf.mxu0
  %v428 = vadd.f32 %v336, %v427
  %429 = vmatmul.bf16.gmra.mxu0 %v317
  %v430 = vpop.f32.mrf.mxu0
  %v431 = vadd.f32 %v336, %v430
  %v432 = vpop.f32.mrf.mxu0
  %v433 = vadd.f32 %v336, %v432
  %434 = vdwg.mxu0
  %v435 = vmax.f32 %v396, 0.0
  %v436 = vmax.f32 %v398, 0.0
  %v437 = vmax.f32 %v401, 0.0
  %v438 = vmax.f32 %v403, 0.0
  %v439 = vmax.f32 %v406, 0.0
  %v440 = vmax.f32 %v408, 0.0
  %v441 = vmax.f32 %v411, 0.0
  %v442 = vmax.f32 %v413, 0.0
  %v443 = vmax.f32 %v416, 0.0
  %v444 = vmax.f32 %v418, 0.0
  %v445 = vmax.f32 %v421, 0.0
  %v446 = vmax.f32 %v423, 0.0
  %v447 = vmax.f32 %v426, 0.0
  %v448 = vmax.f32 %v428, 0.0
  %v449 = vmax.f32 %v431, 0.0
  %v450 = vmax.f32 %v433, 0.0
  %v451 = vpack.c.bf16 %v295, %v294
  %v452 = vpack.c.bf16 %v297, %v296
  %v453 = vpack.c.bf16 %v299, %v298
  %v454 = vpack.c.bf16 %v301, %v300
  %v455 = vpack.c.bf16 %v303, %v302
  %v456 = vpack.c.bf16 %v305, %v304
  %v457 = vpack.c.bf16 %v307, %v306
  %v458 = vpack.c.bf16 %v309, %v308
  %459 = vmatpush.bf16.msra.mxu0 %v377
  %460 = vmatpush.bf16.msra.mxu0 %v376
  %461 = vmatpush.bf16.msra.mxu0 %v375
  %462 = vmatpush.bf16.msra.mxu0 %v374
  %463 = vmatpush.bf16.msra.mxu0 %v373
  %464 = vmatpush.bf16.msra.mxu0 %v372
  %465 = vmatpush.bf16.msra.mxu0 %v371
  %466 = vmatpush.bf16.msra.mxu0 %v370
  %467 = vmatmul.bf16.gmra.mxu0 %v451
  %v468 = vpop.f32.mrf.mxu0
  %v469 = vadd.f32 %v336, %v468
  %v470 = vpop.f32.mrf.mxu0
  %v471 = vadd.f32 %v336, %v470
  %472 = vmatmul.bf16.gmra.mxu0 %v452
  %v473 = vpop.f32.mrf.mxu0
  %v474 = vadd.f32 %v336, %v473
  %v475 = vpop.f32.mrf.mxu0
  %v476 = vadd.f32 %v336, %v475
  %477 = vmatmul.bf16.gmra.mxu0 %v453
  %v478 = vpop.f32.mrf.mxu0
  %v479 = vadd.f32 %v336, %v478
  %v480 = vpop.f32.mrf.mxu0
  %v481 = vadd.f32 %v336, %v480
  %482 = vmatmul.bf16.gmra.mxu0 %v454
  %v483 = vpop.f32.mrf.mxu0
  %v484 = vadd.f32 %v336, %v483
  %v485 = vpop.f32.mrf.mxu0
  %v486 = vadd.f32 %v336, %v485
  %487 = vmatmul.bf16.gmra.mxu0 %v455
  %v488 = vpop.f32.mrf.mxu0
  %v489 = vadd.f32 %v336, %v488
  %v490 = vpop.f32.mrf.mxu0
  %v491 = vadd.f32 %v336, %v490
  %492 = vmatmul.bf16.gmra.mxu0 %v456
  %v493 = vpop.f32.mrf.mxu0
  %v494 = vadd.f32 %v336, %v493
  %v495 = vpop.f32.mrf.mxu0
  %v496 = vadd.f32 %v336, %v495
  %497 = vmatmul.bf16.gmra.mxu0 %v457
  %v498 = vpop.f32.mrf.mxu0
  %v499 = vadd.f32 %v336, %v498
  %v500 = vpop.f32.mrf.mxu0
  %v501 = vadd.f32 %v336, %v500
  %502 = vmatmul.bf16.gmra.mxu0 %v458
  %v503 = vpop.f32.mrf.mxu0
  %v504 = vadd.f32 %v336, %v503
  %v505 = vpop.f32.mrf.mxu0
  %v506 = vadd.f32 %v336, %v505
  %507 = vdwg.mxu0
  %v508 = vmax.f32 %v469, 0.0
  %v509 = vmax.f32 %v471, 0.0
  %v510 = vmax.f32 %v474, 0.0
  %v511 = vmax.f32 %v476, 0.0
  %v512 = vmax.f32 %v479, 0.0
  %v513 = vmax.f32 %v481, 0.0
  %v514 = vmax.f32 %v484, 0.0
  %v515 = vmax.f32 %v486, 0.0
  %v516 = vmax.f32 %v489, 0.0
  %v517 = vmax.f32 %v491, 0.0
  %v518 = vmax.f32 %v494, 0.0
  %v519 = vmax.f32 %v496, 0.0
  %v520 = vmax.f32 %v499, 0.0
  %v521 = vmax.f32 %v501, 0.0
  %v522 = vmax.f32 %v504, 0.0
  %v523 = vmax.f32 %v506, 0.0
  %v524 = vpack.c.bf16 %v436, %v435
  %v525 = vpack.c.bf16 %v438, %v437
  %v526 = vpack.c.bf16 %v440, %v439
  %v527 = vpack.c.bf16 %v442, %v441
  %v528 = vpack.c.bf16 %v444, %v443
  %v529 = vpack.c.bf16 %v446, %v445
  %v530 = vpack.c.bf16 %v448, %v447
  %v531 = vpack.c.bf16 %v450, %v449
  %v532 = vld [vmem:[%s5] sm:$0xf]
  %v533 = vld [vmem:[%s5 + $0x4] sm:$0xf]
  %v534 = vld [vmem:[%s5 + $0x8] sm:$0xf]
  %v535 = vld [vmem:[%s5 + $0xc] sm:$0xf]
  %v536 = vld [vmem:[%s5 + $0x10] sm:$0xf]
  %v537 = vld [vmem:[%s5 + $0x14] sm:$0xf]
  %v538 = vld [vmem:[%s5 + $0x18] sm:$0xf]
  %v539 = vld [vmem:[%s5 + $0x1c] sm:$0xf]
  %v540 = vld [vmem:[%s6] sm:$0x1]
  %v542 = vperm.slane %v540, 0
  %v552 = vunpack.c.l.b16 %v532
  %v553 = vunpack.c.l.b16 %v533
  %v554 = vunpack.c.l.b16 %v534
  %v555 = vunpack.c.l.b16 %v535
  %v556 = vunpack.c.l.b16 %v536
  %v557 = vunpack.c.l.b16 %v537
  %v558 = vunpack.c.l.b16 %v538
  %v559 = vunpack.c.l.b16 %v539
  %v560 = vpack.c.b16 %v553, %v552
  %v561 = vpack.c.b16 %v555, %v554
  %v562 = vpack.c.b16 %v557, %v556
  %v563 = vpack.c.b16 %v559, %v558
  %v569 = vsel %vm123, %v524, 0
  %v572 = vsel %vm123, %v525, 0
  %v575 = vsel %vm123, %v526, 0
  %v578 = vsel %vm123, %v527, 0
  %v581 = vsel %vm123, %v528, 0
  %v584 = vsel %vm123, %v529, 0
  %v587 = vsel %vm123, %v530, 0
  %v590 = vsel %vm123, %v531, 0
  %592 = vmatpush.bf16.msra.mxu0 0
  %593 = vmatpush.bf16.msra.mxu0 0
  %594 = vmatpush.bf16.msra.mxu0 0
  %595 = vmatpush.bf16.msra.mxu0 0
  %596 = vmatpush.bf16.msra.mxu0 %v563
  %597 = vmatpush.bf16.msra.mxu0 %v562
  %598 = vmatpush.bf16.msra.mxu0 %v561
  %599 = vmatpush.bf16.msra.mxu0 %v560
  %600 = vmatmul.bf16.gmra.mxu0 %v569
  %v601 = vpop.f32.mrf.mxu0
  %v602 = vadd.f32 %v542, %v601
  %v603 = vpop.f32.mrf.mxu0
  %v604 = vadd.f32 %v542, %v603
  %605 = vmatmul.bf16.gmra.mxu0 %v572
  %v606 = vpop.f32.mrf.mxu0
  %v607 = vadd.f32 %v542, %v606
  %v608 = vpop.f32.mrf.mxu0
  %v609 = vadd.f32 %v542, %v608
  %610 = vmatmul.bf16.gmra.mxu0 %v575
  %v611 = vpop.f32.mrf.mxu0
  %v612 = vadd.f32 %v542, %v611
  %v613 = vpop.f32.mrf.mxu0
  %v614 = vadd.f32 %v542, %v613
  %615 = vmatmul.bf16.gmra.mxu0 %v578
  %v616 = vpop.f32.mrf.mxu0
  %v617 = vadd.f32 %v542, %v616
  %v618 = vpop.f32.mrf.mxu0
  %v619 = vadd.f32 %v542, %v618
  %620 = vmatmul.bf16.gmra.mxu0 %v581
  %v621 = vpop.f32.mrf.mxu0
  %v622 = vadd.f32 %v542, %v621
  %v623 = vpop.f32.mrf.mxu0
  %v624 = vadd.f32 %v542, %v623
  %625 = vmatmul.bf16.gmra.mxu0 %v584
  %v626 = vpop.f32.mrf.mxu0
  %v627 = vadd.f32 %v542, %v626
  %v628 = vpop.f32.mrf.mxu0
  %v629 = vadd.f32 %v542, %v628
  %630 = vmatmul.bf16.gmra.mxu0 %v587
  %v631 = vpop.f32.mrf.mxu0
  %v632 = vadd.f32 %v542, %v631
  %v633 = vpop.f32.mrf.mxu0
  %v634 = vadd.f32 %v542, %v633
  %635 = vmatmul.bf16.gmra.mxu0 %v590
  %v636 = vpop.f32.mrf.mxu0
  %v637 = vadd.f32 %v542, %v636
  %v638 = vpop.f32.mrf.mxu0
  %v639 = vadd.f32 %v542, %v638
  %640 = vdwg.mxu0
  %v641 = vpack.c.bf16 %v509, %v508
  %v642 = vpack.c.bf16 %v511, %v510
  %v643 = vpack.c.bf16 %v513, %v512
  %v644 = vpack.c.bf16 %v515, %v514
  %v645 = vpack.c.bf16 %v517, %v516
  %v646 = vpack.c.bf16 %v519, %v518
  %v647 = vpack.c.bf16 %v521, %v520
  %v648 = vpack.c.bf16 %v523, %v522
  %v650 = vsel %vm123, %v641, 0
  %v653 = vsel %vm123, %v642, 0
  %v656 = vsel %vm123, %v643, 0
  %v659 = vsel %vm123, %v644, 0
  %v662 = vsel %vm123, %v645, 0
  %v665 = vsel %vm123, %v646, 0
  %v668 = vsel %vm123, %v647, 0
  %v671 = vsel %vm123, %v648, 0
  %673 = vmatpush.bf16.msra.mxu0 0
  %674 = vmatpush.bf16.msra.mxu0 0
  %675 = vmatpush.bf16.msra.mxu0 0
  %676 = vmatpush.bf16.msra.mxu0 0
  %677 = vmatpush.bf16.msra.mxu0 %v563
  %678 = vmatpush.bf16.msra.mxu0 %v562
  %679 = vmatpush.bf16.msra.mxu0 %v561
  %680 = vmatpush.bf16.msra.mxu0 %v560
  %681 = vmatmul.bf16.gmra.mxu0 %v650
  %v682 = vpop.f32.mrf.mxu0
  %v683 = vadd.f32 %v542, %v682
  %v684 = vpop.f32.mrf.mxu0
  %v685 = vadd.f32 %v542, %v684
  %686 = vmatmul.bf16.gmra.mxu0 %v653
  %v687 = vpop.f32.mrf.mxu0
  %v688 = vadd.f32 %v542, %v687
  %v689 = vpop.f32.mrf.mxu0
  %v690 = vadd.f32 %v542, %v689
  %691 = vmatmul.bf16.gmra.mxu0 %v656
  %v692 = vpop.f32.mrf.mxu0
  %v693 = vadd.f32 %v542, %v692
  %v694 = vpop.f32.mrf.mxu0
  %v695 = vadd.f32 %v542, %v694
  %696 = vmatmul.bf16.gmra.mxu0 %v659
  %v697 = vpop.f32.mrf.mxu0
  %v698 = vadd.f32 %v542, %v697
  %v699 = vpop.f32.mrf.mxu0
  %v700 = vadd.f32 %v542, %v699
  %701 = vmatmul.bf16.gmra.mxu0 %v662
  %v702 = vpop.f32.mrf.mxu0
  %v703 = vadd.f32 %v542, %v702
  %v704 = vpop.f32.mrf.mxu0
  %v705 = vadd.f32 %v542, %v704
  %706 = vmatmul.bf16.gmra.mxu0 %v665
  %v707 = vpop.f32.mrf.mxu0
  %v708 = vadd.f32 %v542, %v707
  %v709 = vpop.f32.mrf.mxu0
  %v710 = vadd.f32 %v542, %v709
  %711 = vmatmul.bf16.gmra.mxu0 %v668
  %v712 = vpop.f32.mrf.mxu0
  %v713 = vadd.f32 %v542, %v712
  %v714 = vpop.f32.mrf.mxu0
  %v715 = vadd.f32 %v542, %v714
  %716 = vmatmul.bf16.gmra.mxu0 %v671
  %v717 = vpop.f32.mrf.mxu0
  %v718 = vadd.f32 %v542, %v717
  %v719 = vpop.f32.mrf.mxu0
  %v720 = vadd.f32 %v542, %v719
  %721 = vdwg.mxu0
  %722 = vst [vmem:[%s14] sm:$0xff] %v602
  %723 = vst [vmem:[%s14 + $0x8] sm:$0xff] %v604
  %724 = vst [vmem:[%s14 + $0x10] sm:$0xff] %v607
  %725 = vst [vmem:[%s14 + $0x18] sm:$0xff] %v609
  %726 = vst [vmem:[%s14 + $0x20] sm:$0xff] %v612
  %727 = vst [vmem:[%s14 + $0x28] sm:$0xff] %v614
  %728 = vst [vmem:[%s14 + $0x30] sm:$0xff] %v617
  %729 = vst [vmem:[%s14 + $0x38] sm:$0xff] %v619
  %730 = vst [vmem:[%s14 + $0x40] sm:$0xff] %v622
  %731 = vst [vmem:[%s14 + $0x48] sm:$0xff] %v624
  %732 = vst [vmem:[%s14 + $0x50] sm:$0xff] %v627
  %733 = vst [vmem:[%s14 + $0x58] sm:$0xff] %v629
  %734 = vst [vmem:[%s14 + $0x60] sm:$0xff] %v632
  %735 = vst [vmem:[%s14 + $0x68] sm:$0xff] %v634
  %736 = vst [vmem:[%s14 + $0x70] sm:$0xff] %v637
  %737 = vst [vmem:[%s14 + $0x78] sm:$0xff] %v639
  %738 = vst [vmem:[%s14 + $0x80] sm:$0xff] %v683
  %739 = vst [vmem:[%s14 + $0x88] sm:$0xff] %v685
  %740 = vst [vmem:[%s14 + $0x90] sm:$0xff] %v688
  %741 = vst [vmem:[%s14 + $0x98] sm:$0xff] %v690
  %742 = vst [vmem:[%s14 + $0xa0] sm:$0xff] %v693
  %743 = vst [vmem:[%s14 + $0xa8] sm:$0xff] %v695
  %744 = vst [vmem:[%s14 + $0xb0] sm:$0xff] %v698
  %745 = vst [vmem:[%s14 + $0xb8] sm:$0xff] %v700
  %746 = vst [vmem:[%s14 + $0xc0] sm:$0xff] %v703
  %747 = vst [vmem:[%s14 + $0xc8] sm:$0xff] %v705
  %748 = vst [vmem:[%s14 + $0xd0] sm:$0xff] %v708
  %749 = vst [vmem:[%s14 + $0xd8] sm:$0xff] %v710
  %750 = vst [vmem:[%s14 + $0xe0] sm:$0xff] %v713
  %751 = vst [vmem:[%s14 + $0xe8] sm:$0xff] %v715
  %752 = vst [vmem:[%s14 + $0xf0] sm:$0xff] %v718
  %753 = vst [vmem:[%s14 + $0xf8] sm:$0xff] %v720
  %v754 = vpack.c.bf16 %v604, %v602
  %v755 = vpack.c.bf16 %v609, %v607
  %v756 = vpack.c.bf16 %v614, %v612
  %v757 = vpack.c.bf16 %v619, %v617
  %v758 = vpack.c.bf16 %v624, %v622
  %v759 = vpack.c.bf16 %v629, %v627
  %v760 = vpack.c.bf16 %v634, %v632
  %v761 = vpack.c.bf16 %v639, %v637
  %v762 = vld [vmem:[%s7] sm:$0xf]
  %v763 = vld [vmem:[%s7 + $0x4] sm:$0xf]
  %v764 = vld [vmem:[%s7 + $0x8] sm:$0xf]
  %v765 = vld [vmem:[%s7 + $0xc] sm:$0xf]
  %v766 = vld [vmem:[%s7 + $0x10] sm:$0xf]
  %v767 = vld [vmem:[%s7 + $0x14] sm:$0xf]
  %v768 = vld [vmem:[%s7 + $0x18] sm:$0xf]
  %v769 = vld [vmem:[%s7 + $0x1c] sm:$0xf]
  %v770 = vld [vmem:[%s7 + $0x20] sm:$0xf]
  %v771 = vld [vmem:[%s7 + $0x24] sm:$0xf]
  %v772 = vld [vmem:[%s7 + $0x28] sm:$0xf]
  %v773 = vld [vmem:[%s7 + $0x2c] sm:$0xf]
  %v774 = vld [vmem:[%s7 + $0x30] sm:$0xf]
  %v775 = vld [vmem:[%s7 + $0x34] sm:$0xf]
  %v776 = vld [vmem:[%s7 + $0x38] sm:$0xf]
  %v777 = vld [vmem:[%s7 + $0x3c] sm:$0xf]
  %v778 = vld [vmem:[%s8] sm:$0x1]
  %v780 = vperm.slane %v778, 0
  %v798 = vunpack.c.l.b16 %v762
  %v799 = vunpack.c.l.b16 %v763
  %v800 = vunpack.c.l.b16 %v764
  %v801 = vunpack.c.l.b16 %v765
  %v802 = vunpack.c.l.b16 %v766
  %v803 = vunpack.c.l.b16 %v767
  %v804 = vunpack.c.l.b16 %v768
  %v805 = vunpack.c.l.b16 %v769
  %v806 = vunpack.c.l.b16 %v770
  %v807 = vunpack.c.l.b16 %v771
  %v808 = vunpack.c.l.b16 %v772
  %v809 = vunpack.c.l.b16 %v773
  %v810 = vunpack.c.l.b16 %v774
  %v811 = vunpack.c.l.b16 %v775
  %v812 = vunpack.c.l.b16 %v776
  %v813 = vunpack.c.l.b16 %v777
  %v814 = vpack.c.b16 %v799, %v798
  %v815 = vpack.c.b16 %v801, %v800
  %v816 = vpack.c.b16 %v803, %v802
  %v817 = vpack.c.b16 %v805, %v804
  %v818 = vpack.c.b16 %v807, %v806
  %v819 = vpack.c.b16 %v809, %v808
  %v820 = vpack.c.b16 %v811, %v810
  %v821 = vpack.c.b16 %v813, %v812
  %830 = vmatpush.bf16.msra.mxu0 %v821
  %831 = vmatpush.bf16.msra.mxu0 %v820
  %832 = vmatpush.bf16.msra.mxu0 %v819
  %833 = vmatpush.bf16.msra.mxu0 %v818
  %834 = vmatpush.bf16.msra.mxu0 %v817
  %835 = vmatpush.bf16.msra.mxu0 %v816
  %836 = vmatpush.bf16.msra.mxu0 %v815
  %837 = vmatpush.bf16.msra.mxu0 %v814
  %838 = vmatmul.bf16.gmra.mxu0 %v754
  %v839 = vpop.f32.mrf.mxu0
  %v840 = vadd.f32 %v780, %v839
  %v841 = vpop.f32.mrf.mxu0
  %v842 = vadd.f32 %v780, %v841
  %843 = vmatmul.bf16.gmra.mxu0 %v755
  %v844 = vpop.f32.mrf.mxu0
  %v845 = vadd.f32 %v780, %v844
  %v846 = vpop.f32.mrf.mxu0
  %v847 = vadd.f32 %v780, %v846
  %848 = vmatmul.bf16.gmra.mxu0 %v756
  %v849 = vpop.f32.mrf.mxu0
  %v850 = vadd.f32 %v780, %v849
  %v851 = vpop.f32.mrf.mxu0
  %v852 = vadd.f32 %v780, %v851
  %853 = vmatmul.bf16.gmra.mxu0 %v757
  %v854 = vpop.f32.mrf.mxu0
  %v855 = vadd.f32 %v780, %v854
  %v856 = vpop.f32.mrf.mxu0
  %v857 = vadd.f32 %v780, %v856
  %858 = vmatmul.bf16.gmra.mxu0 %v758
  %v859 = vpop.f32.mrf.mxu0
  %v860 = vadd.f32 %v780, %v859
  %v861 = vpop.f32.mrf.mxu0
  %v862 = vadd.f32 %v780, %v861
  %863 = vmatmul.bf16.gmra.mxu0 %v759
  %v864 = vpop.f32.mrf.mxu0
  %v865 = vadd.f32 %v780, %v864
  %v866 = vpop.f32.mrf.mxu0
  %v867 = vadd.f32 %v780, %v866
  %868 = vmatmul.bf16.gmra.mxu0 %v760
  %v869 = vpop.f32.mrf.mxu0
  %v870 = vadd.f32 %v780, %v869
  %v871 = vpop.f32.mrf.mxu0
  %v872 = vadd.f32 %v780, %v871
  %873 = vmatmul.bf16.gmra.mxu0 %v761
  %v874 = vpop.f32.mrf.mxu0
  %v875 = vadd.f32 %v780, %v874
  %v876 = vpop.f32.mrf.mxu0
  %v877 = vadd.f32 %v780, %v876
  %878 = vdwg.mxu0
  %v879 = vmax.f32 %v840, 0.0
  %v880 = vmax.f32 %v842, 0.0
  %v881 = vmax.f32 %v845, 0.0
  %v882 = vmax.f32 %v847, 0.0
  %v883 = vmax.f32 %v850, 0.0
  %v884 = vmax.f32 %v852, 0.0
  %v885 = vmax.f32 %v855, 0.0
  %v886 = vmax.f32 %v857, 0.0
  %v887 = vmax.f32 %v860, 0.0
  %v888 = vmax.f32 %v862, 0.0
  %v889 = vmax.f32 %v865, 0.0
  %v890 = vmax.f32 %v867, 0.0
  %v891 = vmax.f32 %v870, 0.0
  %v892 = vmax.f32 %v872, 0.0
  %v893 = vmax.f32 %v875, 0.0
  %v894 = vmax.f32 %v877, 0.0
  %v895 = vpack.c.bf16 %v685, %v683
  %v896 = vpack.c.bf16 %v690, %v688
  %v897 = vpack.c.bf16 %v695, %v693
  %v898 = vpack.c.bf16 %v700, %v698
  %v899 = vpack.c.bf16 %v705, %v703
  %v900 = vpack.c.bf16 %v710, %v708
  %v901 = vpack.c.bf16 %v715, %v713
  %v902 = vpack.c.bf16 %v720, %v718
  %903 = vmatpush.bf16.msra.mxu0 %v821
  %904 = vmatpush.bf16.msra.mxu0 %v820
  %905 = vmatpush.bf16.msra.mxu0 %v819
  %906 = vmatpush.bf16.msra.mxu0 %v818
  %907 = vmatpush.bf16.msra.mxu0 %v817
  %908 = vmatpush.bf16.msra.mxu0 %v816
  %909 = vmatpush.bf16.msra.mxu0 %v815
  %910 = vmatpush.bf16.msra.mxu0 %v814
  %911 = vmatmul.bf16.gmra.mxu0 %v895
  %v912 = vpop.f32.mrf.mxu0
  %v913 = vadd.f32 %v780, %v912
  %v914 = vpop.f32.mrf.mxu0
  %v915 = vadd.f32 %v780, %v914
  %916 = vmatmul.bf16.gmra.mxu0 %v896
  %v917 = vpop.f32.mrf.mxu0
  %v918 = vadd.f32 %v780, %v917
  %v919 = vpop.f32.mrf.mxu0
  %v920 = vadd.f32 %v780, %v919
  %921 = vmatmul.bf16.gmra.mxu0 %v897
  %v922 = vpop.f32.mrf.mxu0
  %v923 = vadd.f32 %v780, %v922
  %v924 = vpop.f32.mrf.mxu0
  %v925 = vadd.f32 %v780, %v924
  %926 = vmatmul.bf16.gmra.mxu0 %v898
  %v927 = vpop.f32.mrf.mxu0
  %v928 = vadd.f32 %v780, %v927
  %v929 = vpop.f32.mrf.mxu0
  %v930 = vadd.f32 %v780, %v929
  %931 = vmatmul.bf16.gmra.mxu0 %v899
  %v932 = vpop.f32.mrf.mxu0
  %v933 = vadd.f32 %v780, %v932
  %v934 = vpop.f32.mrf.mxu0
  %v935 = vadd.f32 %v780, %v934
  %936 = vmatmul.bf16.gmra.mxu0 %v900
  %v937 = vpop.f32.mrf.mxu0
  %v938 = vadd.f32 %v780, %v937
  %v939 = vpop.f32.mrf.mxu0
  %v940 = vadd.f32 %v780, %v939
  %941 = vmatmul.bf16.gmra.mxu0 %v901
  %v942 = vpop.f32.mrf.mxu0
  %v943 = vadd.f32 %v780, %v942
  %v944 = vpop.f32.mrf.mxu0
  %v945 = vadd.f32 %v780, %v944
  %946 = vmatmul.bf16.gmra.mxu0 %v902
  %v947 = vpop.f32.mrf.mxu0
  %v948 = vadd.f32 %v780, %v947
  %v949 = vpop.f32.mrf.mxu0
  %v950 = vadd.f32 %v780, %v949
  %951 = vdwg.mxu0
  %v952 = vmax.f32 %v913, 0.0
  %v953 = vmax.f32 %v915, 0.0
  %v954 = vmax.f32 %v918, 0.0
  %v955 = vmax.f32 %v920, 0.0
  %v956 = vmax.f32 %v923, 0.0
  %v957 = vmax.f32 %v925, 0.0
  %v958 = vmax.f32 %v928, 0.0
  %v959 = vmax.f32 %v930, 0.0
  %v960 = vmax.f32 %v933, 0.0
  %v961 = vmax.f32 %v935, 0.0
  %v962 = vmax.f32 %v938, 0.0
  %v963 = vmax.f32 %v940, 0.0
  %v964 = vmax.f32 %v943, 0.0
  %v965 = vmax.f32 %v945, 0.0
  %v966 = vmax.f32 %v948, 0.0
  %v967 = vmax.f32 %v950, 0.0
  %v968 = vpack.c.bf16 %v880, %v879
  %v969 = vpack.c.bf16 %v882, %v881
  %v970 = vpack.c.bf16 %v884, %v883
  %v971 = vpack.c.bf16 %v886, %v885
  %v972 = vpack.c.bf16 %v888, %v887
  %v973 = vpack.c.bf16 %v890, %v889
  %v974 = vpack.c.bf16 %v892, %v891
  %v975 = vpack.c.bf16 %v894, %v893
  %v976 = vld [vmem:[%s9] sm:$0xf]
  %v977 = vld [vmem:[%s9 + $0x4] sm:$0xf]
  %v978 = vld [vmem:[%s9 + $0x8] sm:$0xf]
  %v979 = vld [vmem:[%s9 + $0xc] sm:$0xf]
  %v980 = vld [vmem:[%s9 + $0x10] sm:$0xf]
  %v981 = vld [vmem:[%s9 + $0x14] sm:$0xf]
  %v982 = vld [vmem:[%s9 + $0x18] sm:$0xf]
  %v983 = vld [vmem:[%s9 + $0x1c] sm:$0xf]
  %v984 = vld [vmem:[%s10] sm:$0x1]
  %v986 = vperm.slane %v984, 0
  %v996 = vunpack.c.l.b16 %v976
  %v997 = vunpack.c.l.b16 %v977
  %v998 = vunpack.c.l.b16 %v978
  %v999 = vunpack.c.l.b16 %v979
  %v1000 = vunpack.c.l.b16 %v980
  %v1001 = vunpack.c.l.b16 %v981
  %v1002 = vunpack.c.l.b16 %v982
  %v1003 = vunpack.c.l.b16 %v983
  %v1004 = vpack.c.b16 %v997, %v996
  %v1005 = vpack.c.b16 %v999, %v998
  %v1006 = vpack.c.b16 %v1001, %v1000
  %v1007 = vpack.c.b16 %v1003, %v1002
  %v1013 = vsel %vm123, %v968, 0
  %v1016 = vsel %vm123, %v969, 0
  %v1019 = vsel %vm123, %v970, 0
  %v1022 = vsel %vm123, %v971, 0
  %v1025 = vsel %vm123, %v972, 0
  %v1028 = vsel %vm123, %v973, 0
  %v1031 = vsel %vm123, %v974, 0
  %v1034 = vsel %vm123, %v975, 0
  %1036 = vmatpush.bf16.msra.mxu0 0
  %1037 = vmatpush.bf16.msra.mxu0 0
  %1038 = vmatpush.bf16.msra.mxu0 0
  %1039 = vmatpush.bf16.msra.mxu0 0
  %1040 = vmatpush.bf16.msra.mxu0 %v1007
  %1041 = vmatpush.bf16.msra.mxu0 %v1006
  %1042 = vmatpush.bf16.msra.mxu0 %v1005
  %1043 = vmatpush.bf16.msra.mxu0 %v1004
  %1044 = vmatmul.bf16.gmra.mxu0 %v1013
  %v1045 = vpop.f32.mrf.mxu0
  %v1046 = vadd.f32 %v986, %v1045
  %v1047 = vpop.f32.mrf.mxu0
  %v1048 = vadd.f32 %v986, %v1047
  %1049 = vmatmul.bf16.gmra.mxu0 %v1016
  %v1050 = vpop.f32.mrf.mxu0
  %v1051 = vadd.f32 %v986, %v1050
  %v1052 = vpop.f32.mrf.mxu0
  %v1053 = vadd.f32 %v986, %v1052
  %1054 = vmatmul.bf16.gmra.mxu0 %v1019
  %v1055 = vpop.f32.mrf.mxu0
  %v1056 = vadd.f32 %v986, %v1055
  %v1057 = vpop.f32.mrf.mxu0
  %v1058 = vadd.f32 %v986, %v1057
  %1059 = vmatmul.bf16.gmra.mxu0 %v1022
  %v1060 = vpop.f32.mrf.mxu0
  %v1061 = vadd.f32 %v986, %v1060
  %v1062 = vpop.f32.mrf.mxu0
  %v1063 = vadd.f32 %v986, %v1062
  %1064 = vmatmul.bf16.gmra.mxu0 %v1025
  %v1065 = vpop.f32.mrf.mxu0
  %v1066 = vadd.f32 %v986, %v1065
  %v1067 = vpop.f32.mrf.mxu0
  %v1068 = vadd.f32 %v986, %v1067
  %1069 = vmatmul.bf16.gmra.mxu0 %v1028
  %v1070 = vpop.f32.mrf.mxu0
  %v1071 = vadd.f32 %v986, %v1070
  %v1072 = vpop.f32.mrf.mxu0
  %v1073 = vadd.f32 %v986, %v1072
  %1074 = vmatmul.bf16.gmra.mxu0 %v1031
  %v1075 = vpop.f32.mrf.mxu0
  %v1076 = vadd.f32 %v986, %v1075
  %v1077 = vpop.f32.mrf.mxu0
  %v1078 = vadd.f32 %v986, %v1077
  %1079 = vmatmul.bf16.gmra.mxu0 %v1034
  %v1080 = vpop.f32.mrf.mxu0
  %v1081 = vadd.f32 %v986, %v1080
  %v1082 = vpop.f32.mrf.mxu0
  %v1083 = vadd.f32 %v986, %v1082
  %1084 = vdwg.mxu0
  %v1085 = vmax.f32 %v1046, 0.0
  %v1086 = vmax.f32 %v1048, 0.0
  %v1087 = vmax.f32 %v1051, 0.0
  %v1088 = vmax.f32 %v1053, 0.0
  %v1089 = vmax.f32 %v1056, 0.0
  %v1090 = vmax.f32 %v1058, 0.0
  %v1091 = vmax.f32 %v1061, 0.0
  %v1092 = vmax.f32 %v1063, 0.0
  %v1093 = vmax.f32 %v1066, 0.0
  %v1094 = vmax.f32 %v1068, 0.0
  %v1095 = vmax.f32 %v1071, 0.0
  %v1096 = vmax.f32 %v1073, 0.0
  %v1097 = vmax.f32 %v1076, 0.0
  %v1098 = vmax.f32 %v1078, 0.0
  %v1099 = vmax.f32 %v1081, 0.0
  %v1100 = vmax.f32 %v1083, 0.0
  %v1101 = vpack.c.bf16 %v953, %v952
  %v1102 = vpack.c.bf16 %v955, %v954
  %v1103 = vpack.c.bf16 %v957, %v956
  %v1104 = vpack.c.bf16 %v959, %v958
  %v1105 = vpack.c.bf16 %v961, %v960
  %v1106 = vpack.c.bf16 %v963, %v962
  %v1107 = vpack.c.bf16 %v965, %v964
  %v1108 = vpack.c.bf16 %v967, %v966
  %v1110 = vsel %vm123, %v1101, 0
  %v1113 = vsel %vm123, %v1102, 0
  %v1116 = vsel %vm123, %v1103, 0
  %v1119 = vsel %vm123, %v1104, 0
  %v1122 = vsel %vm123, %v1105, 0
  %v1125 = vsel %vm123, %v1106, 0
  %v1128 = vsel %vm123, %v1107, 0
  %v1131 = vsel %vm123, %v1108, 0
  %1133 = vmatpush.bf16.msra.mxu0 0
  %1134 = vmatpush.bf16.msra.mxu0 0
  %1135 = vmatpush.bf16.msra.mxu0 0
  %1136 = vmatpush.bf16.msra.mxu0 0
  %1137 = vmatpush.bf16.msra.mxu0 %v1007
  %1138 = vmatpush.bf16.msra.mxu0 %v1006
  %1139 = vmatpush.bf16.msra.mxu0 %v1005
  %1140 = vmatpush.bf16.msra.mxu0 %v1004
  %1141 = vmatmul.bf16.gmra.mxu0 %v1110
  %v1142 = vpop.f32.mrf.mxu0
  %v1143 = vadd.f32 %v986, %v1142
  %v1144 = vpop.f32.mrf.mxu0
  %v1145 = vadd.f32 %v986, %v1144
  %1146 = vmatmul.bf16.gmra.mxu0 %v1113
  %v1147 = vpop.f32.mrf.mxu0
  %v1148 = vadd.f32 %v986, %v1147
  %v1149 = vpop.f32.mrf.mxu0
  %v1150 = vadd.f32 %v986, %v1149
  %1151 = vmatmul.bf16.gmra.mxu0 %v1116
  %v1152 = vpop.f32.mrf.mxu0
  %v1153 = vadd.f32 %v986, %v1152
  %v1154 = vpop.f32.mrf.mxu0
  %v1155 = vadd.f32 %v986, %v1154
  %1156 = vmatmul.bf16.gmra.mxu0 %v1119
  %v1157 = vpop.f32.mrf.mxu0
  %v1158 = vadd.f32 %v986, %v1157
  %v1159 = vpop.f32.mrf.mxu0
  %v1160 = vadd.f32 %v986, %v1159
  %1161 = vmatmul.bf16.gmra.mxu0 %v1122
  %v1162 = vpop.f32.mrf.mxu0
  %v1163 = vadd.f32 %v986, %v1162
  %v1164 = vpop.f32.mrf.mxu0
  %v1165 = vadd.f32 %v986, %v1164
  %1166 = vmatmul.bf16.gmra.mxu0 %v1125
  %v1167 = vpop.f32.mrf.mxu0
  %v1168 = vadd.f32 %v986, %v1167
  %v1169 = vpop.f32.mrf.mxu0
  %v1170 = vadd.f32 %v986, %v1169
  %1171 = vmatmul.bf16.gmra.mxu0 %v1128
  %v1172 = vpop.f32.mrf.mxu0
  %v1173 = vadd.f32 %v986, %v1172
  %v1174 = vpop.f32.mrf.mxu0
  %v1175 = vadd.f32 %v986, %v1174
  %1176 = vmatmul.bf16.gmra.mxu0 %v1131
  %v1177 = vpop.f32.mrf.mxu0
  %v1178 = vadd.f32 %v986, %v1177
  %v1179 = vpop.f32.mrf.mxu0
  %v1180 = vadd.f32 %v986, %v1179
  %1181 = vdwg.mxu0
  %v1182 = vmax.f32 %v1143, 0.0
  %v1183 = vmax.f32 %v1145, 0.0
  %v1184 = vmax.f32 %v1148, 0.0
  %v1185 = vmax.f32 %v1150, 0.0
  %v1186 = vmax.f32 %v1153, 0.0
  %v1187 = vmax.f32 %v1155, 0.0
  %v1188 = vmax.f32 %v1158, 0.0
  %v1189 = vmax.f32 %v1160, 0.0
  %v1190 = vmax.f32 %v1163, 0.0
  %v1191 = vmax.f32 %v1165, 0.0
  %v1192 = vmax.f32 %v1168, 0.0
  %v1193 = vmax.f32 %v1170, 0.0
  %v1194 = vmax.f32 %v1173, 0.0
  %v1195 = vmax.f32 %v1175, 0.0
  %v1196 = vmax.f32 %v1178, 0.0
  %v1197 = vmax.f32 %v1180, 0.0
  %v1198 = vpack.c.bf16 %v1086, %v1085
  %v1199 = vpack.c.bf16 %v1088, %v1087
  %v1200 = vpack.c.bf16 %v1090, %v1089
  %v1201 = vpack.c.bf16 %v1092, %v1091
  %v1202 = vpack.c.bf16 %v1094, %v1093
  %v1203 = vpack.c.bf16 %v1096, %v1095
  %v1204 = vpack.c.bf16 %v1098, %v1097
  %v1205 = vpack.c.bf16 %v1100, %v1099
  %v1206 = vld [vmem:[%s11] sm:$0xf]
  %v1207 = vld [vmem:[%s11 + $0x4] sm:$0xf]
  %v1208 = vld [vmem:[%s11 + $0x8] sm:$0xf]
  %v1209 = vld [vmem:[%s11 + $0xc] sm:$0xf]
  %v1210 = vld [vmem:[%s11 + $0x10] sm:$0xf]
  %v1211 = vld [vmem:[%s11 + $0x14] sm:$0xf]
  %v1212 = vld [vmem:[%s11 + $0x18] sm:$0xf]
  %v1213 = vld [vmem:[%s11 + $0x1c] sm:$0xf]
  %v1214 = vld [vmem:[%s11 + $0x20] sm:$0xf]
  %v1215 = vld [vmem:[%s11 + $0x24] sm:$0xf]
  %v1216 = vld [vmem:[%s11 + $0x28] sm:$0xf]
  %v1217 = vld [vmem:[%s11 + $0x2c] sm:$0xf]
  %v1218 = vld [vmem:[%s11 + $0x30] sm:$0xf]
  %v1219 = vld [vmem:[%s11 + $0x34] sm:$0xf]
  %v1220 = vld [vmem:[%s11 + $0x38] sm:$0xf]
  %v1221 = vld [vmem:[%s11 + $0x3c] sm:$0xf]
  %v1222 = vld [vmem:[%s12] sm:$0x1]
  %v1224 = vperm.slane %v1222, 0
  %v1242 = vunpack.c.l.b16 %v1206
  %v1243 = vunpack.c.l.b16 %v1207
  %v1244 = vunpack.c.l.b16 %v1208
  %v1245 = vunpack.c.l.b16 %v1209
  %v1246 = vunpack.c.l.b16 %v1210
  %v1247 = vunpack.c.l.b16 %v1211
  %v1248 = vunpack.c.l.b16 %v1212
  %v1249 = vunpack.c.l.b16 %v1213
  %v1250 = vunpack.c.l.b16 %v1214
  %v1251 = vunpack.c.l.b16 %v1215
  %v1252 = vunpack.c.l.b16 %v1216
  %v1253 = vunpack.c.l.b16 %v1217
  %v1254 = vunpack.c.l.b16 %v1218
  %v1255 = vunpack.c.l.b16 %v1219
  %v1256 = vunpack.c.l.b16 %v1220
  %v1257 = vunpack.c.l.b16 %v1221
  %v1258 = vpack.c.b16 %v1243, %v1242
  %v1259 = vpack.c.b16 %v1245, %v1244
  %v1260 = vpack.c.b16 %v1247, %v1246
  %v1261 = vpack.c.b16 %v1249, %v1248
  %v1262 = vpack.c.b16 %v1251, %v1250
  %v1263 = vpack.c.b16 %v1253, %v1252
  %v1264 = vpack.c.b16 %v1255, %v1254
  %v1265 = vpack.c.b16 %v1257, %v1256
  %1274 = vmatpush.bf16.msra.mxu0 %v1265
  %1275 = vmatpush.bf16.msra.mxu0 %v1264
  %1276 = vmatpush.bf16.msra.mxu0 %v1263
  %1277 = vmatpush.bf16.msra.mxu0 %v1262
  %1278 = vmatpush.bf16.msra.mxu0 %v1261
  %1279 = vmatpush.bf16.msra.mxu0 %v1260
  %1280 = vmatpush.bf16.msra.mxu0 %v1259
  %1281 = vmatpush.bf16.msra.mxu0 %v1258
  %1282 = vmatmul.bf16.gmra.mxu0 %v1198
  %v1283 = vpop.f32.mrf.mxu0
  %v1284 = vadd.f32 %v1224, %v1283
  %v1285 = vpop.f32.mrf.mxu0
  %v1286 = vadd.f32 %v1224, %v1285
  %1287 = vmatmul.bf16.gmra.mxu0 %v1199
  %v1288 = vpop.f32.mrf.mxu0
  %v1289 = vadd.f32 %v1224, %v1288
  %v1290 = vpop.f32.mrf.mxu0
  %v1291 = vadd.f32 %v1224, %v1290
  %1292 = vmatmul.bf16.gmra.mxu0 %v1200
  %v1293 = vpop.f32.mrf.mxu0
  %v1294 = vadd.f32 %v1224, %v1293
  %v1295 = vpop.f32.mrf.mxu0
  %v1296 = vadd.f32 %v1224, %v1295
  %1297 = vmatmul.bf16.gmra.mxu0 %v1201
  %v1298 = vpop.f32.mrf.mxu0
  %v1299 = vadd.f32 %v1224, %v1298
  %v1300 = vpop.f32.mrf.mxu0
  %v1301 = vadd.f32 %v1224, %v1300
  %1302 = vmatmul.bf16.gmra.mxu0 %v1202
  %v1303 = vpop.f32.mrf.mxu0
  %v1304 = vadd.f32 %v1224, %v1303
  %v1305 = vpop.f32.mrf.mxu0
  %v1306 = vadd.f32 %v1224, %v1305
  %1307 = vmatmul.bf16.gmra.mxu0 %v1203
  %v1308 = vpop.f32.mrf.mxu0
  %v1309 = vadd.f32 %v1224, %v1308
  %v1310 = vpop.f32.mrf.mxu0
  %v1311 = vadd.f32 %v1224, %v1310
  %1312 = vmatmul.bf16.gmra.mxu0 %v1204
  %v1313 = vpop.f32.mrf.mxu0
  %v1314 = vadd.f32 %v1224, %v1313
  %v1315 = vpop.f32.mrf.mxu0
  %v1316 = vadd.f32 %v1224, %v1315
  %1317 = vmatmul.bf16.gmra.mxu0 %v1205
  %v1318 = vpop.f32.mrf.mxu0
  %v1319 = vadd.f32 %v1224, %v1318
  %v1320 = vpop.f32.mrf.mxu0
  %v1321 = vadd.f32 %v1224, %v1320
  %1322 = vdwg.mxu0
  %1323 = vst [vmem:[%s13] sm:$0xff] %v1284
  %1324 = vst [vmem:[%s13 + $0x8] sm:$0xff] %v1286
  %1325 = vst [vmem:[%s13 + $0x10] sm:$0xff] %v1289
  %1326 = vst [vmem:[%s13 + $0x18] sm:$0xff] %v1291
  %1327 = vst [vmem:[%s13 + $0x20] sm:$0xff] %v1294
  %1328 = vst [vmem:[%s13 + $0x28] sm:$0xff] %v1296
  %1329 = vst [vmem:[%s13 + $0x30] sm:$0xff] %v1299
  %1330 = vst [vmem:[%s13 + $0x38] sm:$0xff] %v1301
  %1331 = vst [vmem:[%s13 + $0x40] sm:$0xff] %v1304
  %1332 = vst [vmem:[%s13 + $0x48] sm:$0xff] %v1306
  %1333 = vst [vmem:[%s13 + $0x50] sm:$0xff] %v1309
  %1334 = vst [vmem:[%s13 + $0x58] sm:$0xff] %v1311
  %1335 = vst [vmem:[%s13 + $0x60] sm:$0xff] %v1314
  %1336 = vst [vmem:[%s13 + $0x68] sm:$0xff] %v1316
  %1337 = vst [vmem:[%s13 + $0x70] sm:$0xff] %v1319
  %1338 = vst [vmem:[%s13 + $0x78] sm:$0xff] %v1321
  %v1339 = vpack.c.bf16 %v1183, %v1182
  %v1340 = vpack.c.bf16 %v1185, %v1184
  %v1341 = vpack.c.bf16 %v1187, %v1186
  %v1342 = vpack.c.bf16 %v1189, %v1188
  %v1343 = vpack.c.bf16 %v1191, %v1190
  %v1344 = vpack.c.bf16 %v1193, %v1192
  %v1345 = vpack.c.bf16 %v1195, %v1194
  %v1346 = vpack.c.bf16 %v1197, %v1196
  %v1347 = vld [vmem:[%s11] sm:$0xf]
  %v1348 = vld [vmem:[%s11 + $0x4] sm:$0xf]
  %v1349 = vld [vmem:[%s11 + $0x8] sm:$0xf]
  %v1350 = vld [vmem:[%s11 + $0xc] sm:$0xf]
  %v1351 = vld [vmem:[%s11 + $0x10] sm:$0xf]
  %v1352 = vld [vmem:[%s11 + $0x14] sm:$0xf]
  %v1353 = vld [vmem:[%s11 + $0x18] sm:$0xf]
  %v1354 = vld [vmem:[%s11 + $0x1c] sm:$0xf]
  %v1355 = vld [vmem:[%s11 + $0x20] sm:$0xf]
  %v1356 = vld [vmem:[%s11 + $0x24] sm:$0xf]
  %v1357 = vld [vmem:[%s11 + $0x28] sm:$0xf]
  %v1358 = vld [vmem:[%s11 + $0x2c] sm:$0xf]
  %v1359 = vld [vmem:[%s11 + $0x30] sm:$0xf]
  %v1360 = vld [vmem:[%s11 + $0x34] sm:$0xf]
  %v1361 = vld [vmem:[%s11 + $0x38] sm:$0xf]
  %v1362 = vld [vmem:[%s11 + $0x3c] sm:$0xf]
  %v1363 = vld [vmem:[%s12] sm:$0x1]
  %v1365 = vperm.slane %v1363, 0
  %v1383 = vunpack.c.l.b16 %v1347
  %v1384 = vunpack.c.l.b16 %v1348
  %v1385 = vunpack.c.l.b16 %v1349
  %v1386 = vunpack.c.l.b16 %v1350
  %v1387 = vunpack.c.l.b16 %v1351
  %v1388 = vunpack.c.l.b16 %v1352
  %v1389 = vunpack.c.l.b16 %v1353
  %v1390 = vunpack.c.l.b16 %v1354
  %v1391 = vunpack.c.l.b16 %v1355
  %v1392 = vunpack.c.l.b16 %v1356
  %v1393 = vunpack.c.l.b16 %v1357
  %v1394 = vunpack.c.l.b16 %v1358
  %v1395 = vunpack.c.l.b16 %v1359
  %v1396 = vunpack.c.l.b16 %v1360
  %v1397 = vunpack.c.l.b16 %v1361
  %v1398 = vunpack.c.l.b16 %v1362
  %v1399 = vpack.c.b16 %v1384, %v1383
  %v1400 = vpack.c.b16 %v1386, %v1385
  %v1401 = vpack.c.b16 %v1388, %v1387
  %v1402 = vpack.c.b16 %v1390, %v1389
  %v1403 = vpack.c.b16 %v1392, %v1391
  %v1404 = vpack.c.b16 %v1394, %v1393
  %v1405 = vpack.c.b16 %v1396, %v1395
  %v1406 = vpack.c.b16 %v1398, %v1397
  %1415 = vmatpush.bf16.msra.mxu0 %v1406
  %1416 = vmatpush.bf16.msra.mxu0 %v1405
  %1417 = vmatpush.bf16.msra.mxu0 %v1404
  %1418 = vmatpush.bf16.msra.mxu0 %v1403
  %1419 = vmatpush.bf16.msra.mxu0 %v1402
  %1420 = vmatpush.bf16.msra.mxu0 %v1401
  %1421 = vmatpush.bf16.msra.mxu0 %v1400
  %1422 = vmatpush.bf16.msra.mxu0 %v1399
  %1423 = vmatmul.bf16.gmra.mxu0 %v1339
  %v1424 = vpop.f32.mrf.mxu0
  %v1425 = vadd.f32 %v1365, %v1424
  %v1426 = vpop.f32.mrf.mxu0
  %v1427 = vadd.f32 %v1365, %v1426
  %1428 = vmatmul.bf16.gmra.mxu0 %v1340
  %v1429 = vpop.f32.mrf.mxu0
  %v1430 = vadd.f32 %v1365, %v1429
  %v1431 = vpop.f32.mrf.mxu0
  %v1432 = vadd.f32 %v1365, %v1431
  %1433 = vmatmul.bf16.gmra.mxu0 %v1341
  %v1434 = vpop.f32.mrf.mxu0
  %v1435 = vadd.f32 %v1365, %v1434
  %v1436 = vpop.f32.mrf.mxu0
  %v1437 = vadd.f32 %v1365, %v1436
  %1438 = vmatmul.bf16.gmra.mxu0 %v1342
  %v1439 = vpop.f32.mrf.mxu0
  %v1440 = vadd.f32 %v1365, %v1439
  %v1441 = vpop.f32.mrf.mxu0
  %v1442 = vadd.f32 %v1365, %v1441
  %1443 = vmatmul.bf16.gmra.mxu0 %v1343
  %v1444 = vpop.f32.mrf.mxu0
  %v1445 = vadd.f32 %v1365, %v1444
  %v1446 = vpop.f32.mrf.mxu0
  %v1447 = vadd.f32 %v1365, %v1446
  %1448 = vmatmul.bf16.gmra.mxu0 %v1344
  %v1449 = vpop.f32.mrf.mxu0
  %v1450 = vadd.f32 %v1365, %v1449
  %v1451 = vpop.f32.mrf.mxu0
  %v1452 = vadd.f32 %v1365, %v1451
  %1453 = vmatmul.bf16.gmra.mxu0 %v1345
  %v1454 = vpop.f32.mrf.mxu0
  %v1455 = vadd.f32 %v1365, %v1454
  %v1456 = vpop.f32.mrf.mxu0
  %v1457 = vadd.f32 %v1365, %v1456
  %1458 = vmatmul.bf16.gmra.mxu0 %v1346
  %v1459 = vpop.f32.mrf.mxu0
  %v1460 = vadd.f32 %v1365, %v1459
  %v1461 = vpop.f32.mrf.mxu0
  %v1462 = vadd.f32 %v1365, %v1461
  %1463 = vdwg.mxu0
  %1464 = vst [vmem:[%s13 + $0x80] sm:$0xff] %v1425
  %1465 = vst [vmem:[%s13 + $0x88] sm:$0xff] %v1427
  %1466 = vst [vmem:[%s13 + $0x90] sm:$0xff] %v1430
  %1467 = vst [vmem:[%s13 + $0x98] sm:$0xff] %v1432
  %1468 = vst [vmem:[%s13 + $0xa0] sm:$0xff] %v1435
  %1469 = vst [vmem:[%s13 + $0xa8] sm:$0xff] %v1437
  %1470 = vst [vmem:[%s13 + $0xb0] sm:$0xff] %v1440
  %1471 = vst [vmem:[%s13 + $0xb8] sm:$0xff] %v1442
  %1472 = vst [vmem:[%s13 + $0xc0] sm:$0xff] %v1445
  %1473 = vst [vmem:[%s13 + $0xc8] sm:$0xff] %v1447
  %1474 = vst [vmem:[%s13 + $0xd0] sm:$0xff] %v1450
  %1475 = vst [vmem:[%s13 + $0xd8] sm:$0xff] %v1452
  %1476 = vst [vmem:[%s13 + $0xe0] sm:$0xff] %v1455
  %1477 = vst [vmem:[%s13 + $0xe8] sm:$0xff] %v1457
  %1478 = vst [vmem:[%s13 + $0xf0] sm:$0xff] %v1460
  %1479 = vst [vmem:[%s13 + $0xf8] sm:$0xff] %v1462
  // Predicated region
  $region54: #{_ae_forward_impl.1} parent=0 // pred_check
    _
  $region55: #{_ae_forward_impl.1} parent=0 // pred_check_branch
    %1481 = sbr.rel (0) target = $region57
  $region56: #{_ae_forward_impl.1} parent=0 // pred_region
    _
  $region57: #{_ae_forward_impl.1} parent=0 // pred_fallthru
    _
  // Predicated region
  $region58: #{_ae_forward_impl.1} parent=0 // pred_check
    _
  $region59: #{_ae_forward_impl.1} parent=0 // pred_check_branch
    %1483 = sbr.rel (0) target = $region61
  $region60: #{_ae_forward_impl.1} parent=0 // pred_region
    _
  $region61: #{_ae_forward_impl.1} parent=0 // pred_fallthru
    _
  // Predicated region
  $region62: #{_ae_forward_impl.1} parent=0 // pred_check
    _
  $region63: #{_ae_forward_impl.1} parent=0 // pred_check_branch
    %1485 = sbr.rel (0) target = $region65
  $region64: #{_ae_forward_impl.1} parent=0 // pred_region
    _
  $region65: #{_ae_forward_impl.1} parent=0 // pred_fallthru
    _
  // Predicated region
  $region66: #{_ae_forward_impl.1} parent=0 // pred_check
    _
  $region67: #{_ae_forward_impl.1} parent=0 // pred_check_branch
    %1487 = sbr.rel (0) target = $region69
  $region68: #{_ae_forward_impl.1} parent=0 // pred_region
    _
  $region69: #{_ae_forward_impl.1} parent=0 // pred_fallthru
    _

</llo_original>
